<compile_context>
chip_gen: v7x
topology: tpu7x:2x2x1
jax: 0.10.0
libtpu: 0.0.40
codegen_flags: <defaults>
</compile_context>

<pallas_src>
import functools

import jax
import jax.numpy as jnp
from jax import lax
from jax.experimental import pallas as pl
from jax.experimental.pallas import tpu as pltpu

EPS = 1e-5
LANES = 128
SUBLANES = 8


def _round_up(x, m):
    return ((x + m - 1) // m) * m


# ----------------------------- fused kernel -----------------------------

def _dense_block_kernel(*refs, num_layers, seq_len, nl_valid, slot0, slotg):
    """refs = (x_hbm, [gamma_i, beta_i, w_i, b_i]*num_layers, out_slab, s1, s2, dma_sem).

    x_hbm:    (NLp, slot0)                  f32 in HBM (memory_space=ANY)
    gamma_i:  (1, slot0 + i*slotg)          f32 (zero on pad lanes)
    beta_i:   (1, slot0 + i*slotg)          f32 (zero on pad lanes)
    w_i:      (slot0 + i*slotg, 3*slotg)    bf16, [W0|W1|W2] packed along N
    b_i:      (1, slotg)                    f32
    out_slab: (NLp, slot0 + L*slotg)        f32 -- the VMEM-resident dense slab
    s1, s2:   (1, slot0 + L*slotg)          f32 scratch -- cached BN column sums
    dma_sem:  DMA semaphore
    """
    x_hbm = refs[0]
    params = refs[1:1 + 4 * num_layers]
    o_ref = refs[1 + 4 * num_layers]
    s1_ref = refs[2 + 4 * num_layers]
    s2_ref = refs[3 + 4 * num_layers]
    dma_sem = refs[4 + 4 * num_layers]

    nl = o_ref.shape[0]
    inv_n = 1.0 / float(nl_valid)

    # x (HBM) -> first lane-slot of the resident slab; no duplicate VMEM copy.
    cp = pltpu.make_async_copy(x_hbm, o_ref.at[:, 0:slot0], dma_sem)
    cp.start()
    cp.wait()

    # Sequence-edge / row-validity masks, shape (nl, 1), computed once.
    row = lax.broadcasted_iota(jnp.int32, (nl, 1), 0)
    pos = row % seq_len
    left_edge = pos == 0
    right_edge = pos == (seq_len - 1)
    row_valid = row < nl_valid

    # Initialize cached BN sums for the input slot (pad rows/lanes are zero, so
    # full-height sums equal valid-row sums).
    x0 = o_ref[:, 0:slot0]
    s1_ref[:, 0:slot0] = jnp.sum(x0, axis=0, keepdims=True)
    s2_ref[:, 0:slot0] = jnp.sum(x0 * x0, axis=0, keepdims=True)

    for i in range(num_layers):
        gamma = params[4 * i][...]
        beta = params[4 * i + 1][...]
        w = params[4 * i + 2][...]          # bf16, (cw, 3*slotg)
        bias = params[4 * i + 3][...]       # f32,  (1, slotg)
        cw = slot0 + i * slotg              # padded input width of this layer
        off = slot0 + i * slotg             # this layer's output lane offset

        cur = o_ref[:, 0:cw]                # growing slab, never leaves VMEM

        # --- BatchNorm1d (training-mode batch stats, biased var) from cached
        #     sums; affine folded into a single scale/shift.
        #     NOTE: E[x^2]-mean^2 in f32 is cancellation-prone for |mean|>>std
        #     (clamped to 0); acceptable for normalized-ish activations.
        s1 = s1_ref[:, 0:cw]
        s2 = s2_ref[:, 0:cw]
        mean = s1 * inv_n
        var = jnp.maximum(s2 * inv_n - mean * mean, 0.0)
        scale = lax.rsqrt(var + EPS) * gamma
        shift = beta - mean * scale
        h = jnp.maximum(cur * scale + shift, 0.0).astype(jnp.bfloat16)

        # --- Conv1d(k=3, pad=1): one MXU matmul against the packed [W0|W1|W2]
        #     rhs, then roll + edge-mask the narrow per-tap outputs and sum.
        #     y[l] = W0·h[l-1] + W1·h[l] + W2·h[l+1]  =>  t0[l-1] + t1[l] + t2[l+1]
        t = jnp.dot(h, w, preferred_element_type=jnp.float32)   # (nl, 3*slotg)
        t0 = t[:, 0:slotg]
        t1 = t[:, slotg:2 * slotg]
        t2 = t[:, 2 * slotg:3 * slotg]
        y = (jnp.where(left_edge, 0.0, pltpu.roll(t0, 1, axis=0))
             + t1
             + jnp.where(right_edge, 0.0, pltpu.roll(t2, nl - 1, axis=0))
             + bias)
        y = jnp.where(row_valid, y, 0.0)    # pad rows stay 0 -> cached stats exact

        o_ref[:, off:off + slotg] = y
        # Extend cached BN sums with the new columns only.
        s1_ref[:, off:off + slotg] = jnp.sum(y, axis=0, keepdims=True)
        s2_ref[:, off:off + slotg] = jnp.sum(y * y, axis=0, keepdims=True)


# ----------------------------- wrapper -----------------------------

def _lane_index(cin, c0, g, slot0, slotg):
    """Dense channel index -> padded lane index inside the kernel slab."""
    idx = []
    for c in range(cin):
        if c < c0:
            idx.append(c)
        else:
            j = (c - c0) // g
            idx.append(slot0 + j * slotg + (c - c0) % g)
    return jnp.asarray(idx, dtype=jnp.int32)


def prepare_kernel_params(torch_params, c0, g, slot0, slotg):
    """torch_params: list of (gamma(C,), beta(C,), w(G,C,3), b(G,)). Returns flat padded list."""
    flat = []
    cin = c0
    for i, (gamma, beta, w_t, b) in enumerate(torch_params):
        cw = slot0 + i * slotg
        lanes = _lane_index(cin, c0, g, slot0, slotg)
        gamma_p = jnp.zeros((1, cw), jnp.float32).at[0, lanes].set(gamma)
        beta_p = jnp.zeros((1, cw), jnp.float32).at[0, lanes].set(beta)
        # Packed rhs [W0 | W1 | W2]: column block k holds w[:, :, k].T (tap k
        # multiplies h[l-1+k]); pad rows/cols stay zero.
        w_p = jnp.zeros((cw, 3 * slotg), jnp.float32)
        for k in range(3):
            w_p = w_p.at[lanes, k * slotg:k * slotg + g].set(w_t[:, :, k].T)
        w_p = w_p.astype(jnp.bfloat16)
        b_p = jnp.zeros((1, slotg), jnp.float32).at[0, :g].set(b)
        flat += [gamma_p, beta_p, w_p, b_p]
        cin += g
    return flat


def dense_block_forward(x_ncl, torch_params, growth_rate):
    """PyTorch-equivalent DenseBlock forward. x_ncl: (N, C, L) f32 -> (N, C+layers*G, L)."""
    n, c0, l = x_ncl.shape
    num_layers = len(torch_params)
    g = growth_rate

    slot0 = _round_up(c0, LANES)
    slotg = _round_up(g, LANES)
    total_w = slot0 + num_layers * slotg

    nl = n * l
    nl_pad = _round_up(nl, SUBLANES)
    # Layout contract relied on by the in-kernel edge masking: rows are the
    # flattened (N, L) axis, so nl % l == 0 and every sequence ends on a
    # right_edge row.
    assert nl % l == 0

    # channels-last slab input, zero-padded to lane/sublane-aligned shape
    x2d = jnp.transpose(x_ncl, (0, 2, 1)).reshape(nl, c0)
    x2d = jnp.pad(x2d, ((0, nl_pad - nl), (0, slot0 - c0)))

    kparams = prepare_kernel_params(torch_params, c0, g, slot0, slotg)

    # True resident-VMEM peak: slab + largest layer's transients + params + stats.
    cw_max = slot0 + max(num_layers - 1, 0) * slotg
    param_bytes = sum(int(p.size) * p.dtype.itemsize for p in kparams)
    est = (nl_pad * total_w * 4            # resident slab (single-buffered output)
           + nl_pad * cw_max * (2 + 4)     # h (bf16) + f32 normalize temporary
           + nl_pad * 3 * slotg * 4        # packed tap-matmul result
           + param_bytes
           + 2 * SUBLANES * total_w * 4)   # s1/s2 scratch (sublane-padded)
    cap = 64 * 1024 * 1024
    try:
        cap = int(getattr(pltpu.get_tpu_info(), "vmem_capacity_bytes", cap))
    except Exception:
        pass
    vmem_limit = int(max(16 * 1024 * 1024,
                         min(cap - 2 * 1024 * 1024, int(1.5 * est) + (8 << 20))))

    vmem = pl.BlockSpec(memory_space=pltpu.MemorySpace.VMEM)
    slab = pl.pallas_call(
        functools.partial(_dense_block_kernel, num_layers=num_layers,
                          seq_len=l, nl_valid=nl, slot0=slot0, slotg=slotg),
        out_shape=jax.ShapeDtypeStruct((nl_pad, total_w), jnp.float32),
        in_specs=[pl.BlockSpec(memory_space=pl.ANY)] + [vmem] * len(kparams),
        out_specs=vmem,
        scratch_shapes=[pltpu.VMEM((1, total_w), jnp.float32),
                        pltpu.VMEM((1, total_w), jnp.float32),
                        pltpu.SemaphoreType.DMA(())],
        compiler_params=pltpu.CompilerParams(vmem_limit_bytes=vmem_limit),
    )(x2d, *kparams)

    # TODO(synk): for chained DenseBlocks, consume the padded channels-last slab
    #             directly (it is exactly this kernel's input layout) instead of
    #             this gather/concat/transpose epilogue's extra HBM round-trip.
    pieces = [slab[:nl, :c0]]
    for i in range(num_layers):
        off = slot0 + i * slotg
        pieces.append(slab[:nl, off:off + g])
    x_all = jnp.concatenate(pieces, axis=1)
    c_total = c0 + num_layers * g
    return jnp.transpose(x_all.reshape(n, l, c_total), (0, 2, 1))


# ------------------- pure-JAX reference (verification) -------------------

def _ref_layer(x_ncl, gamma, beta, w_torch, b):
    mean = jnp.mean(x_ncl, axis=(0, 2), keepdims=True)
    var = jnp.mean((x_ncl - mean) ** 2, axis=(0, 2), keepdims=True)
    h = (x_ncl - mean) * lax.rsqrt(var + EPS) * gamma[:, None] + beta[:, None]
    h = jnp.maximum(h, 0.0)
    l = x_ncl.shape[2]
    hp = jnp.pad(h, ((0, 0), (0, 0), (1, 1)))
    y = sum(jnp.einsum('ncl,oc->nol', hp[:, :, k:k + l], w_torch[:, :, k]) for k in range(3))
    return y + b[None, :, None]


def _ref_block(x_ncl, torch_params):
    x = x_ncl
    for (gamma, beta, w_torch, b) in torch_params:
        new = _ref_layer(x, gamma, beta, w_torch, b)
        x = jnp.concatenate([x, new], axis=1)
    return x


# ----------------------------- param init -----------------------------

def init_params(key, in_channels, growth_rate, num_layers):
    torch_params = []
    c = in_channels
    for _ in range(num_layers):
        key, k1, k2, k3, k4 = jax.random.split(key, 5)
        gamma = 1.0 + 0.1 * jax.random.normal(k1, (c,), jnp.float32)
        beta = 0.1 * jax.random.normal(k2, (c,), jnp.float32)
        w_torch = 0.2 * jax.random.normal(k3, (growth_rate, c, 3), jnp.float32)  # (Cout, Cin, K)
        b = 0.1 * jax.random.normal(k4, (growth_rate,), jnp.float32)
        torch_params.append((gamma, beta, w_torch, b))
        c += growth_rate
    return torch_params


if __name__ == "__main__":
    N, C, L = 2, 4, 16
    GROWTH, NUM_LAYERS = 4, 3

    key = jax.random.PRNGKey(0)
    key, kx = jax.random.split(key)
    x = jax.random.normal(kx, (N, C, L), jnp.float32)  # PyTorch NCL layout

    torch_params = init_params(key, C, GROWTH, NUM_LAYERS)

    out = dense_block_forward(x, torch_params, GROWTH)
    out = jax.block_until_ready(out)

    ref = _ref_block(x, torch_params)
    assert out.shape == (N, C + NUM_LAYERS * GROWTH, L), out.shape
    # bf16 MXU operands (f32 accumulation) -> tolerance at bf16 level.
    assert jnp.allclose(out, ref, rtol=5e-2, atol=5e-2), float(jnp.max(jnp.abs(out - ref)))

    print("KERNEL_OK")
</pallas_src>

<mosaic_0001>
module attributes {stable_mosaic.version = 11 : i64} {
  func.func @_dense_block_kernel(%arg0: memref<32x128xf32, #tpu.memory_space<any>>, %arg1: memref<1x128xf32, #tpu.memory_space<vmem>>, %arg2: memref<1x128xf32, #tpu.memory_space<vmem>>, %arg3: memref<128x384xbf16, #tpu.memory_space<vmem>>, %arg4: memref<1x128xf32, #tpu.memory_space<vmem>>, %arg5: memref<1x256xf32, #tpu.memory_space<vmem>>, %arg6: memref<1x256xf32, #tpu.memory_space<vmem>>, %arg7: memref<256x384xbf16, #tpu.memory_space<vmem>>, %arg8: memref<1x128xf32, #tpu.memory_space<vmem>>, %arg9: memref<1x384xf32, #tpu.memory_space<vmem>>, %arg10: memref<1x384xf32, #tpu.memory_space<vmem>>, %arg11: memref<384x384xbf16, #tpu.memory_space<vmem>>, %arg12: memref<1x128xf32, #tpu.memory_space<vmem>>, %arg13: memref<32x512xf32, #tpu.memory_space<vmem>>, %arg14: memref<1x512xf32, #tpu.memory_space<vmem>>, %arg15: memref<1x512xf32, #tpu.memory_space<vmem>>, %arg16: memref<!tpu.dma_semaphore, #tpu.memory_space<semaphore_mem>>) attributes {dimension_semantics = [], scalar_prefetch = 0 : i64, scratch_operands = 3 : i64, tpu.core_type = #tpu.core_type<tc>} {
    %c0_i32 = arith.constant 0 : i32
    %c0_i32_0 = arith.constant 0 : i32
    %0 = tpu.memref_slice %arg13[%c0_i32, %c0_i32_0] : memref<32x512xf32, #tpu.memory_space<vmem>> -> memref<32x128xf32, #tpu.memory_space<vmem>>
    tpu.enqueue_dma source(%arg0 : memref<32x128xf32, #tpu.memory_space<any>>) target(%0 : memref<32x128xf32, #tpu.memory_space<vmem>>) target_semaphore(%arg16 : memref<!tpu.dma_semaphore, #tpu.memory_space<semaphore_mem>>)
    %c0_i32_1 = arith.constant 0 : i32
    %c0_i32_2 = arith.constant 0 : i32
    %1 = tpu.memref_slice %arg13[%c0_i32_1, %c0_i32_2] : memref<32x512xf32, #tpu.memory_space<vmem>> -> memref<32x128xf32, #tpu.memory_space<vmem>>
    tpu.wait_dma2 semaphore(%arg16 : memref<!tpu.dma_semaphore, #tpu.memory_space<semaphore_mem>>) src(%arg0 : memref<32x128xf32, #tpu.memory_space<any>>) dst(%1 : memref<32x128xf32, #tpu.memory_space<vmem>>)
    %2 = tpu.iota {dimensions = array<i32: 0>} : vector<32x1xi32>
    %c16_i32 = arith.constant 16 : i32
    %c0_i32_3 = arith.constant 0 : i32
    %3 = arith.cmpi eq, %c16_i32, %c0_i32_3 : i32
    %c1_i32 = arith.constant 1 : i32
    %4 = arith.select %3, %c1_i32, %c16_i32 : i32
    %5 = vector.broadcast %4 : i32 to vector<32x1xi32>
    %6 = arith.remsi %2, %5 : vector<32x1xi32>
    %c0_i32_4 = arith.constant 0 : i32
    %7 = vector.broadcast %c0_i32_4 : i32 to vector<32x1xi32>
    %8 = arith.cmpi ne, %6, %7 : vector<32x1xi32>
    %c0_i32_5 = arith.constant 0 : i32
    %9 = vector.broadcast %c0_i32_5 : i32 to vector<32x1xi32>
    %10 = arith.cmpi slt, %6, %9 : vector<32x1xi32>
    %c0_i32_6 = arith.constant 0 : i32
    %11 = arith.cmpi slt, %4, %c0_i32_6 : i32
    %12 = vector.broadcast %11 : i1 to vector<32x1xi1>
    %13 = vector.broadcast %12 : vector<32x1xi1> to vector<32x1xi1>
    %14 = arith.xori %10, %13 : vector<32x1xi1>
    %15 = arith.andi %14, %8 : vector<32x1xi1>
    %16 = vector.broadcast %4 : i32 to vector<32x1xi32>
    %17 = arith.addi %6, %16 : vector<32x1xi32>
    %18 = arith.select %15, %17, %6 : vector<32x1xi1>, vector<32x1xi32>
    %c0_i32_7 = arith.constant 0 : i32
    %19 = vector.broadcast %c0_i32_7 : i32 to vector<32x1xi32>
    %20 = arith.cmpi eq, %18, %19 : vector<32x1xi32>
    %c15_i32 = arith.constant 15 : i32
    %21 = vector.broadcast %c15_i32 : i32 to vector<32x1xi32>
    %22 = arith.cmpi eq, %18, %21 : vector<32x1xi32>
    %c32_i32 = arith.constant 32 : i32
    %23 = vector.broadcast %c32_i32 : i32 to vector<32x1xi32>
    %24 = arith.cmpi slt, %2, %23 : vector<32x1xi32>
    %c0 = arith.constant 0 : index
    %c0_8 = arith.constant 0 : index
    %25 = vector.load %arg13[%c0, %c0_8] : memref<32x512xf32, #tpu.memory_space<vmem>>, vector<32x128xf32>
    %cst = arith.constant dense<0.000000e+00> : vector<128xf32>
    %26 = vector.multi_reduction <add>, %25, %cst [0] : vector<32x128xf32> to vector<128xf32>
    %27 = vector.shape_cast %26 : vector<128xf32> to vector<1x128xf32>
    %c0_9 = arith.constant 0 : index
    %c0_10 = arith.constant 0 : index
    %28 = vector.load %arg14[%c0_9, %c0_10] : memref<1x512xf32, #tpu.memory_space<vmem>>, vector<1x128xf32>
    tpu.vector_store %arg14[%c0_9, %c0_10], %27 {strides = array<i32>} : memref<1x512xf32, #tpu.memory_space<vmem>>, vector<1x128xf32>,
    %29 = arith.mulf %25, %25 : vector<32x128xf32>
    %cst_11 = arith.constant dense<0.000000e+00> : vector<128xf32>
    %30 = vector.multi_reduction <add>, %29, %cst_11 [0] : vector<32x128xf32> to vector<128xf32>
    %31 = vector.shape_cast %30 : vector<128xf32> to vector<1x128xf32>
    %c0_12 = arith.constant 0 : index
    %c0_13 = arith.constant 0 : index
    %32 = vector.load %arg15[%c0_12, %c0_13] : memref<1x512xf32, #tpu.memory_space<vmem>>, vector<1x128xf32>
    tpu.vector_store %arg15[%c0_12, %c0_13], %31 {strides = array<i32>} : memref<1x512xf32, #tpu.memory_space<vmem>>, vector<1x128xf32>,
    %c0_14 = arith.constant 0 : index
    %c0_15 = arith.constant 0 : index
    %33 = vector.load %arg1[%c0_14, %c0_15] : memref<1x128xf32, #tpu.memory_space<vmem>>, vector<1x128xf32>
    %c0_16 = arith.constant 0 : index
    %c0_17 = arith.constant 0 : index
    %34 = vector.load %arg2[%c0_16, %c0_17] : memref<1x128xf32, #tpu.memory_space<vmem>>, vector<1x128xf32>
    %c0_18 = arith.constant 0 : index
    %c0_19 = arith.constant 0 : index
    %35 = vector.load %arg3[%c0_18, %c0_19] : memref<128x384xbf16, #tpu.memory_space<vmem>>, vector<128x384xbf16>
    %c0_20 = arith.constant 0 : index
    %c0_21 = arith.constant 0 : index
    %36 = vector.load %arg4[%c0_20, %c0_21] : memref<1x128xf32, #tpu.memory_space<vmem>>, vector<1x128xf32>
    %c0_22 = arith.constant 0 : index
    %c0_23 = arith.constant 0 : index
    %37 = vector.load %arg13[%c0_22, %c0_23] : memref<32x512xf32, #tpu.memory_space<vmem>>, vector<32x128xf32>
    %c0_24 = arith.constant 0 : index
    %c0_25 = arith.constant 0 : index
    %38 = vector.load %arg14[%c0_24, %c0_25] : memref<1x512xf32, #tpu.memory_space<vmem>>, vector<1x128xf32>
    %c0_26 = arith.constant 0 : index
    %c0_27 = arith.constant 0 : index
    %39 = vector.load %arg15[%c0_26, %c0_27] : memref<1x512xf32, #tpu.memory_space<vmem>>, vector<1x128xf32>
    %cst_28 = arith.constant 3.125000e-02 : f32
    %40 = vector.broadcast %cst_28 : f32 to vector<1x128xf32>
    %41 = arith.mulf %38, %40 : vector<1x128xf32>
    %cst_29 = arith.constant 3.125000e-02 : f32
    %42 = vector.broadcast %cst_29 : f32 to vector<1x128xf32>
    %43 = arith.mulf %39, %42 : vector<1x128xf32>
    %44 = arith.mulf %41, %41 : vector<1x128xf32>
    %45 = arith.subf %43, %44 : vector<1x128xf32>
    %cst_30 = arith.constant 0.000000e+00 : f32
    %46 = vector.broadcast %cst_30 : f32 to vector<1x128xf32>
    %47 = arith.maximumf %45, %46 : vector<1x128xf32>
    %cst_31 = arith.constant 9.99999974E-6 : f32
    %48 = vector.broadcast %cst_31 : f32 to vector<1x128xf32>
    %49 = arith.addf %47, %48 : vector<1x128xf32>
    %50 = math.rsqrt %49 : vector<1x128xf32>
    %51 = arith.mulf %50, %33 : vector<1x128xf32>
    %52 = arith.mulf %41, %51 : vector<1x128xf32>
    %53 = arith.subf %34, %52 : vector<1x128xf32>
    %54 = vector.broadcast %51 : vector<1x128xf32> to vector<32x128xf32>
    %55 = arith.mulf %37, %54 : vector<32x128xf32>
    %56 = vector.broadcast %53 : vector<1x128xf32> to vector<32x128xf32>
    %57 = arith.addf %55, %56 : vector<32x128xf32>
    %cst_32 = arith.constant 0.000000e+00 : f32
    %58 = vector.broadcast %cst_32 : f32 to vector<32x128xf32>
    %59 = arith.maximumf %57, %58 : vector<32x128xf32>
    %60 = arith.truncf %59 : vector<32x128xf32> to vector<32x128xbf16>
    %cst_33 = arith.constant dense<0.000000e+00> : vector<32x384xf32>
    %61 = tpu.matmul %60, %35, %cst_33 {dimension_numbers = #tpu.dot_dimension_numbers<[1], [0], [0], [1], [0, 0, 1, 1], [], []>} : vector<32x128xbf16>, vector<128x384xbf16>, vector<32x384xf32> -> vector<32x384xf32>
    %62 = vector.extract_strided_slice %61 {offsets = [0, 0], sizes = [32, 128], strides = [1, 1]} : vector<32x384xf32> to vector<32x128xf32>
    %63 = vector.extract_strided_slice %61 {offsets = [0, 128], sizes = [32, 128], strides = [1, 1]} : vector<32x384xf32> to vector<32x128xf32>
    %64 = vector.extract_strided_slice %61 {offsets = [0, 256], sizes = [32, 128], strides = [1, 1]} : vector<32x384xf32> to vector<32x128xf32>
    %c1_i32_34 = arith.constant 1 : i32
    %65 = tpu.dynamic_rotate %62 by %c1_i32_34 dim 0 : vector<32x128xf32>, i32 -> vector<32x128xf32>
    %cst_35 = arith.constant 0.000000e+00 : f32
    %66 = vector.shape_cast %20 : vector<32x1xi1> to vector<32x1xi1>
    %67 = vector.broadcast %66 : vector<32x1xi1> to vector<32x128xi1>
    %68 = vector.broadcast %cst_35 : f32 to vector<32x128xf32>
    %69 = arith.select %67, %68, %65 : vector<32x128xi1>, vector<32x128xf32>
    %70 = arith.addf %69, %63 : vector<32x128xf32>
    %c31_i32 = arith.constant 31 : i32
    %71 = tpu.dynamic_rotate %64 by %c31_i32 dim 0 : vector<32x128xf32>, i32 -> vector<32x128xf32>
    %cst_36 = arith.constant 0.000000e+00 : f32
    %72 = vector.shape_cast %22 : vector<32x1xi1> to vector<32x1xi1>
    %73 = vector.broadcast %72 : vector<32x1xi1> to vector<32x128xi1>
    %74 = vector.broadcast %cst_36 : f32 to vector<32x128xf32>
    %75 = arith.select %73, %74, %71 : vector<32x128xi1>, vector<32x128xf32>
    %76 = arith.addf %70, %75 : vector<32x128xf32>
    %77 = vector.broadcast %36 : vector<1x128xf32> to vector<32x128xf32>
    %78 = arith.addf %76, %77 : vector<32x128xf32>
    %cst_37 = arith.constant 0.000000e+00 : f32
    %79 = vector.shape_cast %24 : vector<32x1xi1> to vector<32x1xi1>
    %80 = vector.broadcast %79 : vector<32x1xi1> to vector<32x128xi1>
    %81 = vector.broadcast %cst_37 : f32 to vector<32x128xf32>
    %82 = arith.select %80, %78, %81 : vector<32x128xi1>, vector<32x128xf32>
    %c0_38 = arith.constant 0 : index
    %c128 = arith.constant 128 : index
    %83 = vector.load %arg13[%c0_38, %c128] : memref<32x512xf32, #tpu.memory_space<vmem>>, vector<32x128xf32>
    tpu.vector_store %arg13[%c0_38, %c128], %82 {strides = array<i32>} : memref<32x512xf32, #tpu.memory_space<vmem>>, vector<32x128xf32>,
    %cst_39 = arith.constant dense<0.000000e+00> : vector<128xf32>
    %84 = vector.multi_reduction <add>, %82, %cst_39 [0] : vector<32x128xf32> to vector<128xf32>
    %85 = vector.shape_cast %84 : vector<128xf32> to vector<1x128xf32>
    %c0_40 = arith.constant 0 : index
    %c128_41 = arith.constant 128 : index
    %86 = vector.load %arg14[%c0_40, %c128_41] : memref<1x512xf32, #tpu.memory_space<vmem>>, vector<1x128xf32>
    tpu.vector_store %arg14[%c0_40, %c128_41], %85 {strides = array<i32>} : memref<1x512xf32, #tpu.memory_space<vmem>>, vector<1x128xf32>,
    %87 = arith.mulf %82, %82 : vector<32x128xf32>
    %cst_42 = arith.constant dense<0.000000e+00> : vector<128xf32>
    %88 = vector.multi_reduction <add>, %87, %cst_42 [0] : vector<32x128xf32> to vector<128xf32>
    %89 = vector.shape_cast %88 : vector<128xf32> to vector<1x128xf32>
    %c0_43 = arith.constant 0 : index
    %c128_44 = arith.constant 128 : index
    %90 = vector.load %arg15[%c0_43, %c128_44] : memref<1x512xf32, #tpu.memory_space<vmem>>, vector<1x128xf32>
    tpu.vector_store %arg15[%c0_43, %c128_44], %89 {strides = array<i32>} : memref<1x512xf32, #tpu.memory_space<vmem>>, vector<1x128xf32>,
    %c0_45 = arith.constant 0 : index
    %c0_46 = arith.constant 0 : index
    %91 = vector.load %arg5[%c0_45, %c0_46] : memref<1x256xf32, #tpu.memory_space<vmem>>, vector<1x256xf32>
    %c0_47 = arith.constant 0 : index
    %c0_48 = arith.constant 0 : index
    %92 = vector.load %arg6[%c0_47, %c0_48] : memref<1x256xf32, #tpu.memory_space<vmem>>, vector<1x256xf32>
    %c0_49 = arith.constant 0 : index
    %c0_50 = arith.constant 0 : index
    %93 = vector.load %arg7[%c0_49, %c0_50] : memref<256x384xbf16, #tpu.memory_space<vmem>>, vector<256x384xbf16>
    %c0_51 = arith.constant 0 : index
    %c0_52 = arith.constant 0 : index
    %94 = vector.load %arg8[%c0_51, %c0_52] : memref<1x128xf32, #tpu.memory_space<vmem>>, vector<1x128xf32>
    %c0_53 = arith.constant 0 : index
    %c0_54 = arith.constant 0 : index
    %95 = vector.load %arg13[%c0_53, %c0_54] : memref<32x512xf32, #tpu.memory_space<vmem>>, vector<32x256xf32>
    %c0_55 = arith.constant 0 : index
    %c0_56 = arith.constant 0 : index
    %96 = vector.load %arg14[%c0_55, %c0_56] : memref<1x512xf32, #tpu.memory_space<vmem>>, vector<1x256xf32>
    %c0_57 = arith.constant 0 : index
    %c0_58 = arith.constant 0 : index
    %97 = vector.load %arg15[%c0_57, %c0_58] : memref<1x512xf32, #tpu.memory_space<vmem>>, vector<1x256xf32>
    %cst_59 = arith.constant 3.125000e-02 : f32
    %98 = vector.broadcast %cst_59 : f32 to vector<1x256xf32>
    %99 = arith.mulf %96, %98 : vector<1x256xf32>
    %cst_60 = arith.constant 3.125000e-02 : f32
    %100 = vector.broadcast %cst_60 : f32 to vector<1x256xf32>
    %101 = arith.mulf %97, %100 : vector<1x256xf32>
    %102 = arith.mulf %99, %99 : vector<1x256xf32>
    %103 = arith.subf %101, %102 : vector<1x256xf32>
    %cst_61 = arith.constant 0.000000e+00 : f32
    %104 = vector.broadcast %cst_61 : f32 to vector<1x256xf32>
    %105 = arith.maximumf %103, %104 : vector<1x256xf32>
    %cst_62 = arith.constant 9.99999974E-6 : f32
    %106 = vector.broadcast %cst_62 : f32 to vector<1x256xf32>
    %107 = arith.addf %105, %106 : vector<1x256xf32>
    %108 = math.rsqrt %107 : vector<1x256xf32>
    %109 = arith.mulf %108, %91 : vector<1x256xf32>
    %110 = arith.mulf %99, %109 : vector<1x256xf32>
    %111 = arith.subf %92, %110 : vector<1x256xf32>
    %112 = vector.broadcast %109 : vector<1x256xf32> to vector<32x256xf32>
    %113 = arith.mulf %95, %112 : vector<32x256xf32>
    %114 = vector.broadcast %111 : vector<1x256xf32> to vector<32x256xf32>
    %115 = arith.addf %113, %114 : vector<32x256xf32>
    %cst_63 = arith.constant 0.000000e+00 : f32
    %116 = vector.broadcast %cst_63 : f32 to vector<32x256xf32>
    %117 = arith.maximumf %115, %116 : vector<32x256xf32>
    %118 = arith.truncf %117 : vector<32x256xf32> to vector<32x256xbf16>
    %cst_64 = arith.constant dense<0.000000e+00> : vector<32x384xf32>
    %119 = tpu.matmul %118, %93, %cst_64 {dimension_numbers = #tpu.dot_dimension_numbers<[1], [0], [0], [1], [0, 0, 1, 1], [], []>} : vector<32x256xbf16>, vector<256x384xbf16>, vector<32x384xf32> -> vector<32x384xf32>
    %120 = vector.extract_strided_slice %119 {offsets = [0, 0], sizes = [32, 128], strides = [1, 1]} : vector<32x384xf32> to vector<32x128xf32>
    %121 = vector.extract_strided_slice %119 {offsets = [0, 128], sizes = [32, 128], strides = [1, 1]} : vector<32x384xf32> to vector<32x128xf32>
    %122 = vector.extract_strided_slice %119 {offsets = [0, 256], sizes = [32, 128], strides = [1, 1]} : vector<32x384xf32> to vector<32x128xf32>
    %c1_i32_65 = arith.constant 1 : i32
    %123 = tpu.dynamic_rotate %120 by %c1_i32_65 dim 0 : vector<32x128xf32>, i32 -> vector<32x128xf32>
    %cst_66 = arith.constant 0.000000e+00 : f32
    %124 = vector.shape_cast %20 : vector<32x1xi1> to vector<32x1xi1>
    %125 = vector.broadcast %124 : vector<32x1xi1> to vector<32x128xi1>
    %126 = vector.broadcast %cst_66 : f32 to vector<32x128xf32>
    %127 = arith.select %125, %126, %123 : vector<32x128xi1>, vector<32x128xf32>
    %128 = arith.addf %127, %121 : vector<32x128xf32>
    %c31_i32_67 = arith.constant 31 : i32
    %129 = tpu.dynamic_rotate %122 by %c31_i32_67 dim 0 : vector<32x128xf32>, i32 -> vector<32x128xf32>
    %cst_68 = arith.constant 0.000000e+00 : f32
    %130 = vector.shape_cast %22 : vector<32x1xi1> to vector<32x1xi1>
    %131 = vector.broadcast %130 : vector<32x1xi1> to vector<32x128xi1>
    %132 = vector.broadcast %cst_68 : f32 to vector<32x128xf32>
    %133 = arith.select %131, %132, %129 : vector<32x128xi1>, vector<32x128xf32>
    %134 = arith.addf %128, %133 : vector<32x128xf32>
    %135 = vector.broadcast %94 : vector<1x128xf32> to vector<32x128xf32>
    %136 = arith.addf %134, %135 : vector<32x128xf32>
    %cst_69 = arith.constant 0.000000e+00 : f32
    %137 = vector.shape_cast %24 : vector<32x1xi1> to vector<32x1xi1>
    %138 = vector.broadcast %137 : vector<32x1xi1> to vector<32x128xi1>
    %139 = vector.broadcast %cst_69 : f32 to vector<32x128xf32>
    %140 = arith.select %138, %136, %139 : vector<32x128xi1>, vector<32x128xf32>
    %c0_70 = arith.constant 0 : index
    %c256 = arith.constant 256 : index
    %141 = vector.load %arg13[%c0_70, %c256] : memref<32x512xf32, #tpu.memory_space<vmem>>, vector<32x128xf32>
    tpu.vector_store %arg13[%c0_70, %c256], %140 {strides = array<i32>} : memref<32x512xf32, #tpu.memory_space<vmem>>, vector<32x128xf32>,
    %cst_71 = arith.constant dense<0.000000e+00> : vector<128xf32>
    %142 = vector.multi_reduction <add>, %140, %cst_71 [0] : vector<32x128xf32> to vector<128xf32>
    %143 = vector.shape_cast %142 : vector<128xf32> to vector<1x128xf32>
    %c0_72 = arith.constant 0 : index
    %c256_73 = arith.constant 256 : index
    %144 = vector.load %arg14[%c0_72, %c256_73] : memref<1x512xf32, #tpu.memory_space<vmem>>, vector<1x128xf32>
    tpu.vector_store %arg14[%c0_72, %c256_73], %143 {strides = array<i32>} : memref<1x512xf32, #tpu.memory_space<vmem>>, vector<1x128xf32>,
    %145 = arith.mulf %140, %140 : vector<32x128xf32>
    %cst_74 = arith.constant dense<0.000000e+00> : vector<128xf32>
    %146 = vector.multi_reduction <add>, %145, %cst_74 [0] : vector<32x128xf32> to vector<128xf32>
    %147 = vector.shape_cast %146 : vector<128xf32> to vector<1x128xf32>
    %c0_75 = arith.constant 0 : index
    %c256_76 = arith.constant 256 : index
    %148 = vector.load %arg15[%c0_75, %c256_76] : memref<1x512xf32, #tpu.memory_space<vmem>>, vector<1x128xf32>
    tpu.vector_store %arg15[%c0_75, %c256_76], %147 {strides = array<i32>} : memref<1x512xf32, #tpu.memory_space<vmem>>, vector<1x128xf32>,
    %c0_77 = arith.constant 0 : index
    %c0_78 = arith.constant 0 : index
    %149 = vector.load %arg9[%c0_77, %c0_78] : memref<1x384xf32, #tpu.memory_space<vmem>>, vector<1x384xf32>
    %c0_79 = arith.constant 0 : index
    %c0_80 = arith.constant 0 : index
    %150 = vector.load %arg10[%c0_79, %c0_80] : memref<1x384xf32, #tpu.memory_space<vmem>>, vector<1x384xf32>
    %c0_81 = arith.constant 0 : index
    %c0_82 = arith.constant 0 : index
    %151 = vector.load %arg11[%c0_81, %c0_82] : memref<384x384xbf16, #tpu.memory_space<vmem>>, vector<384x384xbf16>
    %c0_83 = arith.constant 0 : index
    %c0_84 = arith.constant 0 : index
    %152 = vector.load %arg12[%c0_83, %c0_84] : memref<1x128xf32, #tpu.memory_space<vmem>>, vector<1x128xf32>
    %c0_85 = arith.constant 0 : index
    %c0_86 = arith.constant 0 : index
    %153 = vector.load %arg13[%c0_85, %c0_86] : memref<32x512xf32, #tpu.memory_space<vmem>>, vector<32x384xf32>
    %c0_87 = arith.constant 0 : index
    %c0_88 = arith.constant 0 : index
    %154 = vector.load %arg14[%c0_87, %c0_88] : memref<1x512xf32, #tpu.memory_space<vmem>>, vector<1x384xf32>
    %c0_89 = arith.constant 0 : index
    %c0_90 = arith.constant 0 : index
    %155 = vector.load %arg15[%c0_89, %c0_90] : memref<1x512xf32, #tpu.memory_space<vmem>>, vector<1x384xf32>
    %cst_91 = arith.constant 3.125000e-02 : f32
    %156 = vector.broadcast %cst_91 : f32 to vector<1x384xf32>
    %157 = arith.mulf %154, %156 : vector<1x384xf32>
    %cst_92 = arith.constant 3.125000e-02 : f32
    %158 = vector.broadcast %cst_92 : f32 to vector<1x384xf32>
    %159 = arith.mulf %155, %158 : vector<1x384xf32>
    %160 = arith.mulf %157, %157 : vector<1x384xf32>
    %161 = arith.subf %159, %160 : vector<1x384xf32>
    %cst_93 = arith.constant 0.000000e+00 : f32
    %162 = vector.broadcast %cst_93 : f32 to vector<1x384xf32>
    %163 = arith.maximumf %161, %162 : vector<1x384xf32>
    %cst_94 = arith.constant 9.99999974E-6 : f32
    %164 = vector.broadcast %cst_94 : f32 to vector<1x384xf32>
    %165 = arith.addf %163, %164 : vector<1x384xf32>
    %166 = math.rsqrt %165 : vector<1x384xf32>
    %167 = arith.mulf %166, %149 : vector<1x384xf32>
    %168 = arith.mulf %157, %167 : vector<1x384xf32>
    %169 = arith.subf %150, %168 : vector<1x384xf32>
    %170 = vector.broadcast %167 : vector<1x384xf32> to vector<32x384xf32>
    %171 = arith.mulf %153, %170 : vector<32x384xf32>
    %172 = vector.broadcast %169 : vector<1x384xf32> to vector<32x384xf32>
    %173 = arith.addf %171, %172 : vector<32x384xf32>
    %cst_95 = arith.constant 0.000000e+00 : f32
    %174 = vector.broadcast %cst_95 : f32 to vector<32x384xf32>
    %175 = arith.maximumf %173, %174 : vector<32x384xf32>
    %176 = arith.truncf %175 : vector<32x384xf32> to vector<32x384xbf16>
    %cst_96 = arith.constant dense<0.000000e+00> : vector<32x384xf32>
    %177 = tpu.matmul %176, %151, %cst_96 {dimension_numbers = #tpu.dot_dimension_numbers<[1], [0], [0], [1], [0, 0, 1, 1], [], []>} : vector<32x384xbf16>, vector<384x384xbf16>, vector<32x384xf32> -> vector<32x384xf32>
    %178 = vector.extract_strided_slice %177 {offsets = [0, 0], sizes = [32, 128], strides = [1, 1]} : vector<32x384xf32> to vector<32x128xf32>
    %179 = vector.extract_strided_slice %177 {offsets = [0, 128], sizes = [32, 128], strides = [1, 1]} : vector<32x384xf32> to vector<32x128xf32>
    %180 = vector.extract_strided_slice %177 {offsets = [0, 256], sizes = [32, 128], strides = [1, 1]} : vector<32x384xf32> to vector<32x128xf32>
    %c1_i32_97 = arith.constant 1 : i32
    %181 = tpu.dynamic_rotate %178 by %c1_i32_97 dim 0 : vector<32x128xf32>, i32 -> vector<32x128xf32>
    %cst_98 = arith.constant 0.000000e+00 : f32
    %182 = vector.shape_cast %20 : vector<32x1xi1> to vector<32x1xi1>
    %183 = vector.broadcast %182 : vector<32x1xi1> to vector<32x128xi1>
    %184 = vector.broadcast %cst_98 : f32 to vector<32x128xf32>
    %185 = arith.select %183, %184, %181 : vector<32x128xi1>, vector<32x128xf32>
    %186 = arith.addf %185, %179 : vector<32x128xf32>
    %c31_i32_99 = arith.constant 31 : i32
    %187 = tpu.dynamic_rotate %180 by %c31_i32_99 dim 0 : vector<32x128xf32>, i32 -> vector<32x128xf32>
    %cst_100 = arith.constant 0.000000e+00 : f32
    %188 = vector.shape_cast %22 : vector<32x1xi1> to vector<32x1xi1>
    %189 = vector.broadcast %188 : vector<32x1xi1> to vector<32x128xi1>
    %190 = vector.broadcast %cst_100 : f32 to vector<32x128xf32>
    %191 = arith.select %189, %190, %187 : vector<32x128xi1>, vector<32x128xf32>
    %192 = arith.addf %186, %191 : vector<32x128xf32>
    %193 = vector.broadcast %152 : vector<1x128xf32> to vector<32x128xf32>
    %194 = arith.addf %192, %193 : vector<32x128xf32>
    %cst_101 = arith.constant 0.000000e+00 : f32
    %195 = vector.shape_cast %24 : vector<32x1xi1> to vector<32x1xi1>
    %196 = vector.broadcast %195 : vector<32x1xi1> to vector<32x128xi1>
    %197 = vector.broadcast %cst_101 : f32 to vector<32x128xf32>
    %198 = arith.select %196, %194, %197 : vector<32x128xi1>, vector<32x128xf32>
    %c0_102 = arith.constant 0 : index
    %c384 = arith.constant 384 : index
    %199 = vector.load %arg13[%c0_102, %c384] : memref<32x512xf32, #tpu.memory_space<vmem>>, vector<32x128xf32>
    tpu.vector_store %arg13[%c0_102, %c384], %198 {strides = array<i32>} : memref<32x512xf32, #tpu.memory_space<vmem>>, vector<32x128xf32>,
    %cst_103 = arith.constant dense<0.000000e+00> : vector<128xf32>
    %200 = vector.multi_reduction <add>, %198, %cst_103 [0] : vector<32x128xf32> to vector<128xf32>
    %201 = vector.shape_cast %200 : vector<128xf32> to vector<1x128xf32>
    %c0_104 = arith.constant 0 : index
    %c384_105 = arith.constant 384 : index
    %202 = vector.load %arg14[%c0_104, %c384_105] : memref<1x512xf32, #tpu.memory_space<vmem>>, vector<1x128xf32>
    tpu.vector_store %arg14[%c0_104, %c384_105], %201 {strides = array<i32>} : memref<1x512xf32, #tpu.memory_space<vmem>>, vector<1x128xf32>,
    %203 = arith.mulf %198, %198 : vector<32x128xf32>
    %cst_106 = arith.constant dense<0.000000e+00> : vector<128xf32>
    %204 = vector.multi_reduction <add>, %203, %cst_106 [0] : vector<32x128xf32> to vector<128xf32>
    %205 = vector.shape_cast %204 : vector<128xf32> to vector<1x128xf32>
    %c0_107 = arith.constant 0 : index
    %c384_108 = arith.constant 384 : index
    %206 = vector.load %arg15[%c0_107, %c384_108] : memref<1x512xf32, #tpu.memory_space<vmem>>, vector<1x128xf32>
    tpu.vector_store %arg15[%c0_107, %c384_108], %205 {strides = array<i32>} : memref<1x512xf32, #tpu.memory_space<vmem>>, vector<1x128xf32>,
    return
  }
}

</mosaic_0001>

<llo_original>
// kernel: tpu_custom_call.1
$region0: #{tpu_custom_call.1}
  #allocation0 [shape = 'u32[]', space=smem, size = 0x4, offset = 0x4, fixed_abs, tag = 'smem constant byte address 0x4 - core index']
  #allocation1 [shape = 'u32[144,128]{1,0:T(1,128)}', space=vmem, size = 0x12000, scoped, tag = 'internal scratch']
  #allocation2 [shape = 'f32[1,512]{1,0:T(1,128)}', space=vmem, size = 0x800, scoped, tag = 'scratch operand']
  #allocation3 [shape = 'f32[1,512]{1,0:T(1,128)}', space=vmem, size = 0x800, scoped, tag = 'scratch operand']
  #allocation4 [shape = 's32[1]{0}', space=sflag, size = 0x4, scoped, tag = 'scratch operand']
  #allocation14 [shape = 's32[]', space=sflag, size = 0x4, offset = 0, fixed_abs, tag = 'sflag constant byte address 0x0 - dummy sync flag']
  %s0 = inlined_call_operand.hbm [shape: f32[32,128], index: 0, kind: input, shape index: {}]
  %s1 = inlined_call_operand.vmem [shape: f32[1,128], index: 1, kind: input, shape index: {}]
  %s2 = inlined_call_operand.hbm [shape: f32[1,128], index: 2, kind: input, shape index: {}]
  %s3 = inlined_call_operand.hbm [shape: bf16[128,384], index: 3, kind: input, shape index: {}]
  %s4 = inlined_call_operand.vmem [shape: f32[1,128], index: 4, kind: input, shape index: {}]
  %s5 = inlined_call_operand.vmem [shape: f32[1,256], index: 5, kind: input, shape index: {}]
  %s6 = inlined_call_operand.vmem [shape: f32[1,256], index: 6, kind: input, shape index: {}]
  %s7 = inlined_call_operand.hbm [shape: bf16[256,384], index: 7, kind: input, shape index: {}]
  %s8 = inlined_call_operand.vmem [shape: f32[1,128], index: 8, kind: input, shape index: {}]
  %s9 = inlined_call_operand.vmem [shape: f32[1,384], index: 9, kind: input, shape index: {}]
  %s10 = inlined_call_operand.vmem [shape: f32[1,384], index: 10, kind: input, shape index: {}]
  %s11 = inlined_call_operand.hbm [shape: bf16[384,384], index: 11, kind: input, shape index: {}]
  %s12 = inlined_call_operand.vmem [shape: f32[1,128], index: 12, kind: input, shape index: {}]
  %s13 = inlined_call_operand.hbm [shape: f32[32,512], index: 13, kind: output, shape index: {}]
  %s14 = sld [smem:[#allocation0]]
  $region74: #{tpu_custom_call.1} parent=0
    _
  %s16 = ssub.s32 1, %s14
  %s17 = scalar_select 0, %s16, %s14
  $region1: #{tpu_custom_call.1} parent=0
    #allocation5 [shape = 'u8[512]{0}', space=vmem, size = 0x400, scoped, tag = 'input window, operand 2, single buffered']
    #allocation6 [shape = 's32[1]{0}', space=sflag, size = 0x4, scoped, tag = 'scoped memory for tpu_custom_call.1']
    #allocation7 [shape = 's32[1]{0}', space=sflag, size = 0x4, scoped, tag = 'scoped memory for tpu_custom_call.1']
    #allocation8 [shape = 'u8[98304]{0}', space=vmem, size = 0x18000, scoped, tag = 'input window, operand 3, single buffered']
    #allocation9 [shape = 's32[1]{0}', space=sflag, size = 0x4, scoped, tag = 'scoped memory for tpu_custom_call.1']
    #allocation10 [shape = 'u8[196608]{0}', space=vmem, size = 0x30000, scoped, tag = 'input window, operand 7, single buffered']
    #allocation11 [shape = 'u8[294912]{0}', space=vmem, size = 0x48000, scoped, tag = 'input window, operand 11, single buffered']
    #allocation12 [shape = 's32[1]{0}', space=sflag, size = 0x4, scoped, tag = 'scoped memory for tpu_custom_call.1']
    #allocation13 [shape = 'u8[65536]{0}', space=vmem, size = 0x10000, scoped, tag = 'output window, operand 0, single buffered']
    %18 = vsyncpa [#allocation6], 0
    %19 = vsyncpa [#allocation9], 0
    %20 = vsyncpa [#allocation12], 0
    %21 = vsyncpa [#allocation7], 0
    // Predicated region
    $region2: #{tpu_custom_call.1} parent=1 // pred_check
      _
    $region3: #{tpu_custom_call.1} parent=1 // pred_check_branch
      %23 = sbr.rel (0) target = $region5
    $region4: #{tpu_custom_call.1} parent=1 // pred_region
      _
    $region5: #{tpu_custom_call.1} parent=1 // pred_fallthru
      _
    // Predicated region
    $region6: #{tpu_custom_call.1} parent=1 // pred_check
      _
    $region7: #{tpu_custom_call.1} parent=1 // pred_check_branch
      %25 = sbr.rel (0) target = $region9
    $region8: #{tpu_custom_call.1} parent=1 // pred_region
      %s27 = ssub.s32 16, 16
      %28 = vsyncadd [#allocation6], %s27
      %s30 = sshll.u32 [#allocation5], 4
      %s31 = int_to_ptr.vmem [resolvable:$true] %s30
      %33 = dma.hbm_to_vmem [thread:$0]  %s2, 16, %s31, [#allocation6]
    $region9: #{tpu_custom_call.1} parent=1 // pred_fallthru
      _
    // Predicated region
    $region10: #{tpu_custom_call.1} parent=1 // pred_check
      _
    $region11: #{tpu_custom_call.1} parent=1 // pred_check_branch
      %35 = sbr.rel (0) target = $region13
    $region12: #{tpu_custom_call.1} parent=1 // pred_region
      %s37 = ssub.s32 3072, 3072
      %38 = vsyncadd [#allocation9], %s37
      %s39 = sshll.u32 [#allocation8], 4
      %s40 = int_to_ptr.vmem [resolvable:$true] %s39
      %45 = dma.hbm_to_vmem [thread:$0]  %s3, 3072, %s40, [#allocation9], 192, 192, 12
    $region13: #{tpu_custom_call.1} parent=1 // pred_fallthru
      _
    // Predicated region
    $region14: #{tpu_custom_call.1} parent=1 // pred_check
      _
    $region15: #{tpu_custom_call.1} parent=1 // pred_check_branch
      %47 = sbr.rel (0) target = $region17
    $region16: #{tpu_custom_call.1} parent=1 // pred_region
      _
    $region17: #{tpu_custom_call.1} parent=1 // pred_fallthru
      _
    // Predicated region
    $region18: #{tpu_custom_call.1} parent=1 // pred_check
      _
    $region19: #{tpu_custom_call.1} parent=1 // pred_check_branch
      %49 = sbr.rel (0) target = $region21
    $region20: #{tpu_custom_call.1} parent=1 // pred_region
      _
    $region21: #{tpu_custom_call.1} parent=1 // pred_fallthru
      _
    // Predicated region
    $region22: #{tpu_custom_call.1} parent=1 // pred_check
      _
    $region23: #{tpu_custom_call.1} parent=1 // pred_check_branch
      %51 = sbr.rel (0) target = $region25
    $region24: #{tpu_custom_call.1} parent=1 // pred_region
      _
    $region25: #{tpu_custom_call.1} parent=1 // pred_fallthru
      _
    // Predicated region
    $region26: #{tpu_custom_call.1} parent=1 // pred_check
      _
    $region27: #{tpu_custom_call.1} parent=1 // pred_check_branch
      %53 = sbr.rel (0) target = $region29
    $region28: #{tpu_custom_call.1} parent=1 // pred_region
      %s55 = ssub.s32 6144, 6144
      %56 = vsyncadd [#allocation9], %s55
      %s57 = sshll.u32 [#allocation10], 4
      %s58 = int_to_ptr.vmem [resolvable:$true] %s57
      %63 = dma.hbm_to_vmem [thread:$0]  %s7, 6144, %s58, [#allocation9], 192, 192, 12
    $region29: #{tpu_custom_call.1} parent=1 // pred_fallthru
      _
    // Predicated region
    $region30: #{tpu_custom_call.1} parent=1 // pred_check
      _
    $region31: #{tpu_custom_call.1} parent=1 // pred_check_branch
      %65 = sbr.rel (0) target = $region33
    $region32: #{tpu_custom_call.1} parent=1 // pred_region
      _
    $region33: #{tpu_custom_call.1} parent=1 // pred_fallthru
      _
    // Predicated region
    $region34: #{tpu_custom_call.1} parent=1 // pred_check
      _
    $region35: #{tpu_custom_call.1} parent=1 // pred_check_branch
      %67 = sbr.rel (0) target = $region37
    $region36: #{tpu_custom_call.1} parent=1 // pred_region
      _
    $region37: #{tpu_custom_call.1} parent=1 // pred_fallthru
      _
    // Predicated region
    $region38: #{tpu_custom_call.1} parent=1 // pred_check
      _
    $region39: #{tpu_custom_call.1} parent=1 // pred_check_branch
      %69 = sbr.rel (0) target = $region41
    $region40: #{tpu_custom_call.1} parent=1 // pred_region
      _
    $region41: #{tpu_custom_call.1} parent=1 // pred_fallthru
      _
    // Predicated region
    $region42: #{tpu_custom_call.1} parent=1 // pred_check
      _
    $region43: #{tpu_custom_call.1} parent=1 // pred_check_branch
      %71 = sbr.rel (0) target = $region45
    $region44: #{tpu_custom_call.1} parent=1 // pred_region
      %s73 = ssub.s32 9216, 9216
      %74 = vsyncadd [#allocation12], %s73
      %s75 = sshll.u32 [#allocation11], 4
      %s76 = int_to_ptr.vmem [resolvable:$true] %s75
      %81 = dma.hbm_to_vmem [thread:$0]  %s11, 9216, %s76, [#allocation12], 192, 192, 12
    $region45: #{tpu_custom_call.1} parent=1 // pred_fallthru
      _
    // Predicated region
    $region46: #{tpu_custom_call.1} parent=1 // pred_check
      _
    $region47: #{tpu_custom_call.1} parent=1 // pred_check_branch
      %83 = sbr.rel (0) target = $region49
    $region48: #{tpu_custom_call.1} parent=1 // pred_region
      _
    $region49: #{tpu_custom_call.1} parent=1 // pred_fallthru
      _
    // Predicated region
    $region50: #{tpu_custom_call.1} parent=1 // pred_check
      _
    $region51: #{tpu_custom_call.1} parent=1 // pred_check_branch
      %85 = sbr.rel (0) target = $region53
    $region52: #{tpu_custom_call.1} parent=1 // pred_region
      %86 = dma.done [#allocation6], 16
    $region53: #{tpu_custom_call.1} parent=1 // pred_fallthru
      _
    // Predicated region
    $region54: #{tpu_custom_call.1} parent=1 // pred_check
      _
    $region55: #{tpu_custom_call.1} parent=1 // pred_check_branch
      %88 = sbr.rel (0) target = $region57
    $region56: #{tpu_custom_call.1} parent=1 // pred_region
      %89 = dma.done [#allocation9], 3072
    $region57: #{tpu_custom_call.1} parent=1 // pred_fallthru
      _
    // Predicated region
    $region58: #{tpu_custom_call.1} parent=1 // pred_check
      _
    $region59: #{tpu_custom_call.1} parent=1 // pred_check_branch
      %91 = sbr.rel (0) target = $region61
    $region60: #{tpu_custom_call.1} parent=1 // pred_region
      %92 = dma.done [#allocation9], 6144
    $region61: #{tpu_custom_call.1} parent=1 // pred_fallthru
      _
    // Predicated region
    $region62: #{tpu_custom_call.1} parent=1 // pred_check
      _
    $region63: #{tpu_custom_call.1} parent=1 // pred_check_branch
      %94 = sbr.rel (0) target = $region65
    $region64: #{tpu_custom_call.1} parent=1 // pred_region
      %95 = dma.done [#allocation12], 9216
    $region65: #{tpu_custom_call.1} parent=1 // pred_fallthru
      _
    %s98 = sshll.u32 [#allocation13], 4
    %s99 = int_to_ptr.vmem [resolvable:$true] %s98
    %101 = dma.hbm_to_vmem [thread:$0]  %s0, 512, %s99, [#allocation4], 128, 512, 8
    %s102 = smul.u32 8, 4
    %s103 = smul.u32 %s102, 1
    %s104 = sshll.u32 %s103, 4
    %105 = dma.done [#allocation4], %s104
    %v106 = vlaneseq
    %v107 = vshrl.u32 %v106, 7
    %v108 = vadd.s32 %v107, 8
    %v109 = vadd.s32 %v107, 16
    %v110 = vadd.s32 %v107, 24
    %vm111 = vcmp.lt.s32.totalorder %v107, 0
    %v112 = vsub.s32 0, %v107
    %v113 = vsel %vm111, %v112, %v107
    %v114 = vshrl.u32 %v113, 4
    %v115 = vand.u32 %v113, 15
    %v116 = vsub.s32 0, %v115
    %v117 = vsel %vm111, %v116, %v115
    %vm118 = vcmp.lt.s32.totalorder %v108, 0
    %v119 = vsub.s32 0, %v108
    %v120 = vsel %vm118, %v119, %v108
    %v121 = vshrl.u32 %v120, 4
    %v122 = vand.u32 %v120, 15
    %v123 = vsub.s32 0, %v122
    %v124 = vsel %vm118, %v123, %v122
    %vm125 = vcmp.lt.s32.totalorder %v109, 0
    %v126 = vsub.s32 0, %v109
    %v127 = vsel %vm125, %v126, %v109
    %v128 = vshrl.u32 %v127, 4
    %v129 = vand.u32 %v127, 15
    %v130 = vsub.s32 0, %v129
    %v131 = vsel %vm125, %v130, %v129
    %vm132 = vcmp.lt.s32.totalorder %v110, 0
    %v133 = vsub.s32 0, %v110
    %v134 = vsel %vm132, %v133, %v110
    %v135 = vshrl.u32 %v134, 4
    %v136 = vand.u32 %v134, 15
    %v137 = vsub.s32 0, %v136
    %v138 = vsel %vm132, %v137, %v136
    %vm139 = vcmp.ne.s32.totalorder %v117, 0
    %vm140 = vcmp.ne.s32.totalorder %v124, 0
    %vm141 = vcmp.ne.s32.totalorder %v131, 0
    %vm142 = vcmp.ne.s32.totalorder %v138, 0
    %vm143 = vcmp.lt.s32.totalorder %v117, 0
    %vm144 = vcmp.lt.s32.totalorder %v124, 0
    %vm145 = vcmp.lt.s32.totalorder %v131, 0
    %vm146 = vcmp.lt.s32.totalorder %v138, 0
    %vm147 = vmand %vm143, %vm139
    %vm148 = vmand %vm144, %vm140
    %vm149 = vmand %vm145, %vm141
    %vm150 = vmand %vm146, %vm142
    %v151 = vadd.s32 %v117, 16
    %v152 = vadd.s32 %v124, 16
    %v153 = vadd.s32 %v131, 16
    %v154 = vadd.s32 %v138, 16
    %v155 = vsel %vm147, %v151, %v117
    %v156 = vsel %vm148, %v152, %v124
    %v157 = vsel %vm149, %v153, %v131
    %v158 = vsel %vm150, %v154, %v138
    %vm159 = vcmp.eq.s32.totalorder %v155, 0
    %vm160 = vcmp.eq.s32.totalorder %v156, 0
    %vm161 = vcmp.eq.s32.totalorder %v157, 0
    %vm162 = vcmp.eq.s32.totalorder %v158, 0
    %vm163 = vcmp.eq.s32.totalorder %v155, 15
    %vm164 = vcmp.eq.s32.totalorder %v156, 15
    %vm165 = vcmp.eq.s32.totalorder %v157, 15
    %vm166 = vcmp.eq.s32.totalorder %v158, 15
    %vm167 = vcmp.lt.s32.totalorder %v107, 32
    %vm168 = vcmp.lt.s32.totalorder %v108, 32
    %vm169 = vcmp.lt.s32.totalorder %v109, 32
    %vm170 = vcmp.lt.s32.totalorder %v110, 32
    %v171 = vld [vmem:[#allocation13] sm:$0xff]
    %v172 = vld [vmem:[#allocation13 + $0x20] sm:$0xff]
    %v173 = vld [vmem:[#allocation13 + $0x40] sm:$0xff]
    %v174 = vld [vmem:[#allocation13 + $0x60] sm:$0xff]
    %v175 = vadd.f32 %v171, %v172
    %v176 = vadd.f32 %v175, %v173
    %v177 = vadd.f32 %v176, %v174
    %v178 = vrot.slane %v177, 4
    %v179 = vadd.f32 %v177, %v178
    %v180 = vrot.slane %v179, 2
    %v181 = vadd.f32 %v179, %v180
    %v182 = vrot.slane %v181, 1
    %v183 = vadd.f32 %v181, %v182
    %v184 = vlaneseq
    %vm185 = vcmp.ge.s32.totalorder %v184, 0
    %vm186 = vcmp.lt.s32.totalorder %v184, 128
    %vm187 = vmand %vm185, %vm186
    %188 = vst.msk [vmem:[#allocation2] sm:$0x1] %vm187, %v183
    %v189 = vmul.f32 %v171, %v171
    %v190 = vmul.f32 %v172, %v172
    %v191 = vmul.f32 %v173, %v173
    %v192 = vmul.f32 %v174, %v174
    %v193 = vadd.f32 %v189, %v190
    %v194 = vadd.f32 %v193, %v191
    %v195 = vadd.f32 %v194, %v192
    %v196 = vrot.slane %v195, 4
    %v197 = vadd.f32 %v195, %v196
    %v198 = vrot.slane %v197, 2
    %v199 = vadd.f32 %v197, %v198
    %v200 = vrot.slane %v199, 1
    %v201 = vadd.f32 %v199, %v200
    %202 = vst.msk [vmem:[#allocation3] sm:$0x1] %vm187, %v201
    %v203 = vld [vmem:[%s1] sm:$0x1]
    %v204 = vld [vmem:[#allocation5] sm:$0x1]
    %v205 = vld [vmem:[#allocation8] sm:$0xff]
    %v206 = vld [vmem:[#allocation8 + $0x8] sm:$0xf]
    %v207 = vld [vmem:[#allocation8 + $0xc] sm:$0xff]
    %v208 = vld [vmem:[#allocation8 + $0x14] sm:$0xf]
    %v209 = vld [vmem:[#allocation8 + $0x18] sm:$0xff]
    %v210 = vld [vmem:[#allocation8 + $0x20] sm:$0xf]
    %v211 = vld [vmem:[#allocation8 + $0x24] sm:$0xff]
    %v212 = vld [vmem:[#allocation8 + $0x2c] sm:$0xf]
    %v213 = vld [vmem:[#allocation8 + $0x30] sm:$0xff]
    %v214 = vld [vmem:[#allocation8 + $0x38] sm:$0xf]
    %v215 = vld [vmem:[#allocation8 + $0x3c] sm:$0xff]
    %v216 = vld [vmem:[#allocation8 + $0x44] sm:$0xf]
    %v217 = vld [vmem:[#allocation8 + $0x48] sm:$0xff]
    %v218 = vld [vmem:[#allocation8 + $0x50] sm:$0xf]
    %v219 = vld [vmem:[#allocation8 + $0x54] sm:$0xff]
    %v220 = vld [vmem:[#allocation8 + $0x5c] sm:$0xf]
    %v221 = vld [vmem:[#allocation8 + $0x60] sm:$0xff]
    %v222 = vld [vmem:[#allocation8 + $0x68] sm:$0xf]
    %v223 = vld [vmem:[#allocation8 + $0x6c] sm:$0xff]
    %v224 = vld [vmem:[#allocation8 + $0x74] sm:$0xf]
    %v225 = vld [vmem:[#allocation8 + $0x78] sm:$0xff]
    %v226 = vld [vmem:[#allocation8 + $0x80] sm:$0xf]
    %v227 = vld [vmem:[#allocation8 + $0x84] sm:$0xff]
    %v228 = vld [vmem:[#allocation8 + $0x8c] sm:$0xf]
    %v229 = vld [vmem:[#allocation8 + $0x90] sm:$0xff]
    %v230 = vld [vmem:[#allocation8 + $0x98] sm:$0xf]
    %v231 = vld [vmem:[#allocation8 + $0x9c] sm:$0xff]
    %v232 = vld [vmem:[#allocation8 + $0xa4] sm:$0xf]
    %v233 = vld [vmem:[#allocation8 + $0xa8] sm:$0xff]
    %v234 = vld [vmem:[#allocation8 + $0xb0] sm:$0xf]
    %v235 = vld [vmem:[#allocation8 + $0xb4] sm:$0xff]
    %v236 = vld [vmem:[#allocation8 + $0xbc] sm:$0xf]
    %v237 = vld [vmem:[%s4] sm:$0x1]
    %v238 = vld [vmem:[#allocation13] sm:$0xff]
    %v239 = vld [vmem:[#allocation13 + $0x20] sm:$0xff]
    %v240 = vld [vmem:[#allocation13 + $0x40] sm:$0xff]
    %v241 = vld [vmem:[#allocation13 + $0x60] sm:$0xff]
    %v242 = vld [vmem:[#allocation2] sm:$0x1]
    %v243 = vld [vmem:[#allocation3] sm:$0x1]
    %v244 = vmul.f32 %v242, 0.03125
    %v245 = vmul.f32 %v243, 0.03125
    %v246 = vmul.f32 %v244, %v244
    %v247 = vsub.f32 %v245, %v246
    %v248 = vmax.f32 %v247, 0.0
    %v249 = vadd.f32 %v248, 1e-05
    %v250 = vrsqrt.pop %v249
    %v251 = vmul.f32 %v250, %v203
    %v252 = vmul.f32 %v244, %v251
    %v253 = vsub.f32 %v204, %v252
    %v255 = vlaneseq
    %v256 = vshrl.u32 %v255, 7
    %v257 = vsub.s32 0, %v256
    %v258 = vrot.slane %v251, %v257
    %v260 = vmul.f32 %v238, %v258
    %v261 = vmul.f32 %v239, %v258
    %v262 = vmul.f32 %v240, %v258
    %v263 = vmul.f32 %v241, %v258
    %v265 = vlaneseq
    %v266 = vshrl.u32 %v265, 7
    %v267 = vsub.s32 0, %v266
    %v268 = vrot.slane %v253, %v267
    %v270 = vadd.f32 %v260, %v268
    %v271 = vadd.f32 %v261, %v268
    %v272 = vadd.f32 %v262, %v268
    %v273 = vadd.f32 %v263, %v268
    %v274 = vmax.f32 %v270, 0.0
    %v275 = vmax.f32 %v271, 0.0
    %v276 = vmax.f32 %v272, 0.0
    %v277 = vmax.f32 %v273, 0.0
    %v278 = vpack.c.bf16 %v275, %v274
    %v279 = vpack.c.bf16 %v277, %v276
    %v312 = vunpack.c.l.b16 %v205
    %v313 = vunpack.c.h.b16 %v205
    %v314 = vunpack.c.l.b16 %v206
    %v315 = vunpack.c.l.b16 %v207
    %v316 = vunpack.c.h.b16 %v207
    %v317 = vunpack.c.l.b16 %v208
    %v318 = vunpack.c.l.b16 %v209
    %v319 = vunpack.c.h.b16 %v209
    %v320 = vunpack.c.l.b16 %v210
    %v321 = vunpack.c.l.b16 %v211
    %v322 = vunpack.c.h.b16 %v211
    %v323 = vunpack.c.l.b16 %v212
    %v324 = vunpack.c.l.b16 %v213
    %v325 = vunpack.c.h.b16 %v213
    %v326 = vunpack.c.l.b16 %v214
    %v327 = vunpack.c.l.b16 %v215
    %v328 = vunpack.c.h.b16 %v215
    %v329 = vunpack.c.l.b16 %v216
    %v330 = vunpack.c.l.b16 %v217
    %v331 = vunpack.c.h.b16 %v217
    %v332 = vunpack.c.l.b16 %v218
    %v333 = vunpack.c.l.b16 %v219
    %v334 = vunpack.c.h.b16 %v219
    %v335 = vunpack.c.l.b16 %v220
    %v336 = vunpack.c.l.b16 %v221
    %v337 = vunpack.c.h.b16 %v221
    %v338 = vunpack.c.l.b16 %v222
    %v339 = vunpack.c.l.b16 %v223
    %v340 = vunpack.c.h.b16 %v223
    %v341 = vunpack.c.l.b16 %v224
    %v342 = vunpack.c.l.b16 %v225
    %v343 = vunpack.c.h.b16 %v225
    %v344 = vunpack.c.l.b16 %v226
    %v345 = vunpack.c.l.b16 %v227
    %v346 = vunpack.c.h.b16 %v227
    %v347 = vunpack.c.l.b16 %v228
    %v348 = vunpack.c.l.b16 %v229
    %v349 = vunpack.c.h.b16 %v229
    %v350 = vunpack.c.l.b16 %v230
    %v351 = vunpack.c.l.b16 %v231
    %v352 = vunpack.c.h.b16 %v231
    %v353 = vunpack.c.l.b16 %v232
    %v354 = vunpack.c.l.b16 %v233
    %v355 = vunpack.c.h.b16 %v233
    %v356 = vunpack.c.l.b16 %v234
    %v357 = vunpack.c.l.b16 %v235
    %v358 = vunpack.c.h.b16 %v235
    %v359 = vunpack.c.l.b16 %v236
    %v360 = vpack.c.b16 %v315, %v312
    %v361 = vpack.c.b16 %v316, %v313
    %v362 = vpack.c.b16 %v317, %v314
    %v363 = vpack.c.b16 %v321, %v318
    %v364 = vpack.c.b16 %v322, %v319
    %v365 = vpack.c.b16 %v323, %v320
    %v366 = vpack.c.b16 %v327, %v324
    %v367 = vpack.c.b16 %v328, %v325
    %v368 = vpack.c.b16 %v329, %v326
    %v369 = vpack.c.b16 %v333, %v330
    %v370 = vpack.c.b16 %v334, %v331
    %v371 = vpack.c.b16 %v335, %v332
    %v372 = vpack.c.b16 %v339, %v336
    %v373 = vpack.c.b16 %v340, %v337
    %v374 = vpack.c.b16 %v341, %v338
    %v375 = vpack.c.b16 %v345, %v342
    %v376 = vpack.c.b16 %v346, %v343
    %v377 = vpack.c.b16 %v347, %v344
    %v378 = vpack.c.b16 %v351, %v348
    %v379 = vpack.c.b16 %v352, %v349
    %v380 = vpack.c.b16 %v353, %v350
    %v381 = vpack.c.b16 %v357, %v354
    %v382 = vpack.c.b16 %v358, %v355
    %v383 = vpack.c.b16 %v359, %v356
    %408 = vmatprep.subr.bf16.mxu0 %v361
    %409 = vmatpush1.bf16.msra.mxu0 %v360
    %410 = vmatprep.subr.bf16.mxu0 %v364
    %411 = vmatpush1.bf16.msra.mxu0 %v363
    %412 = vmatprep.subr.bf16.mxu0 %v367
    %413 = vmatpush1.bf16.msra.mxu0 %v366
    %414 = vmatprep.subr.bf16.mxu0 %v370
    %415 = vmatpush1.bf16.msra.mxu0 %v369
    %416 = vmatprep.subr.bf16.mxu0 %v373
    %417 = vmatpush1.bf16.msra.mxu0 %v372
    %418 = vmatprep.subr.bf16.mxu0 %v376
    %419 = vmatpush1.bf16.msra.mxu0 %v375
    %420 = vmatprep.subr.bf16.mxu0 %v379
    %421 = vmatpush1.bf16.msra.mxu0 %v378
    %422 = vmatprep.subr.bf16.mxu0 %v382
    %423 = vmatpush1.bf16.msra.mxu0 %v381
    %424 = vmatprep.subr.bf16.mxu0 0
    %425 = vmatpush1.bf16.msra.mxu0 0
    %426 = vmatprep.subr.bf16.mxu0 0
    %427 = vmatpush1.bf16.msra.mxu0 0
    %428 = vmatprep.subr.bf16.mxu0 0
    %429 = vmatpush1.bf16.msra.mxu0 0
    %430 = vmatprep.subr.bf16.mxu0 0
    %431 = vmatpush1.bf16.msra.mxu0 0
    %432 = vmatprep.subr.bf16.mxu0 0
    %433 = vmatpush1.bf16.msra.mxu0 0
    %434 = vmatprep.subr.bf16.mxu0 0
    %435 = vmatpush1.bf16.msra.mxu0 0
    %436 = vmatprep.subr.bf16.mxu0 0
    %437 = vmatpush1.bf16.msra.mxu0 0
    %438 = vmatprep.subr.bf16.mxu0 0
    %439 = vmatpush1.bf16.msra.mxu0 0
    %440 = vmatprep.mubr.bf16.mxu0 0
    %441 = vmatmul.mubr.bf16.gmra.mrb[0].mxu0 %v278
    %v442 = vpop.f32.mrb[0].mxu0
    %v443 = vadd.f32 0.0, %v442
    %v444 = vpop.f32.mrb[0].mxu0
    %v445 = vadd.f32 0.0, %v444
    %v446 = vpop.f32.mrb[0].mxu0
    %v447 = vadd.f32 0.0, %v446
    %v448 = vpop.f32.mrb[0].mxu0
    %v449 = vadd.f32 0.0, %v448
    %450 = vmatprep.mubr.bf16.mxu0 0
    %451 = vmatmul.mubr.bf16.gmra.mrb[0].mxu0 %v279
    %v452 = vpop.f32.mrb[0].mxu0
    %v453 = vadd.f32 0.0, %v452
    %v454 = vpop.f32.mrb[0].mxu0
    %v455 = vadd.f32 0.0, %v454
    %v456 = vpop.f32.mrb[0].mxu0
    %v457 = vadd.f32 0.0, %v456
    %v458 = vpop.f32.mrb[0].mxu0
    %v459 = vadd.f32 0.0, %v458
    %460 = vdwg.mxu0
    %461 = vmatprep.subr.bf16.mxu0 0
    %462 = vmatpush1.bf16.msra.mxu0 %v362
    %463 = vmatprep.subr.bf16.mxu0 0
    %464 = vmatpush1.bf16.msra.mxu0 %v365
    %465 = vmatprep.subr.bf16.mxu0 0
    %466 = vmatpush1.bf16.msra.mxu0 %v368
    %467 = vmatprep.subr.bf16.mxu0 0
    %468 = vmatpush1.bf16.msra.mxu0 %v371
    %469 = vmatprep.subr.bf16.mxu0 0
    %470 = vmatpush1.bf16.msra.mxu0 %v374
    %471 = vmatprep.subr.bf16.mxu0 0
    %472 = vmatpush1.bf16.msra.mxu0 %v377
    %473 = vmatprep.subr.bf16.mxu0 0
    %474 = vmatpush1.bf16.msra.mxu0 %v380
    %475 = vmatprep.subr.bf16.mxu0 0
    %476 = vmatpush1.bf16.msra.mxu0 %v383
    %477 = vmatprep.subr.bf16.mxu0 0
    %478 = vmatpush1.bf16.msra.mxu0 0
    %479 = vmatprep.subr.bf16.mxu0 0
    %480 = vmatpush1.bf16.msra.mxu0 0
    %481 = vmatprep.subr.bf16.mxu0 0
    %482 = vmatpush1.bf16.msra.mxu0 0
    %483 = vmatprep.subr.bf16.mxu0 0
    %484 = vmatpush1.bf16.msra.mxu0 0
    %485 = vmatprep.subr.bf16.mxu0 0
    %486 = vmatpush1.bf16.msra.mxu0 0
    %487 = vmatprep.subr.bf16.mxu0 0
    %488 = vmatpush1.bf16.msra.mxu0 0
    %489 = vmatprep.subr.bf16.mxu0 0
    %490 = vmatpush1.bf16.msra.mxu0 0
    %491 = vmatprep.subr.bf16.mxu0 0
    %492 = vmatpush1.bf16.msra.mxu0 0
    %493 = vmatprep.mubr.bf16.mxu0 0
    %494 = vmatmul.mubr.bf16.gmra.mrb[0].mxu0 %v278
    %v495 = vpop.f32.mrb[0].mxu0
    %v496 = vadd.f32 0.0, %v495
    %v497 = vpop.f32.mrb[0].mxu0
    %v498 = vpop.f32.mrb[0].mxu0
    %v499 = vadd.f32 0.0, %v498
    %v500 = vpop.f32.mrb[0].mxu0
    %501 = vmatprep.mubr.bf16.mxu0 0
    %502 = vmatmul.mubr.bf16.gmra.mrb[0].mxu0 %v279
    %v503 = vpop.f32.mrb[0].mxu0
    %v504 = vadd.f32 0.0, %v503
    %v505 = vpop.f32.mrb[0].mxu0
    %v506 = vpop.f32.mrb[0].mxu0
    %v507 = vadd.f32 0.0, %v506
    %v508 = vpop.f32.mrb[0].mxu0
    %509 = vdwg.mxu0
    %v510 = vrot.slane %v443, 7
    %v511 = vrot.slane %v447, 7
    %v512 = vrot.slane %v453, 7
    %v513 = vrot.slane %v457, 7
    %vm514 = vcmp.lt.s32.totalorder %v107, 1
    %v515 = vsel %vm514, %v512, %v513
    %v516 = vsel %vm514, %v511, %v512
    %v517 = vsel %vm514, %v510, %v511
    %v518 = vsel %vm514, %v513, %v510
    %v519 = vsel %vm159, 1, 0
    %v520 = vsel %vm160, 1, 0
    %v521 = vsel %vm161, 1, 0
    %v522 = vsel %vm162, 1, 0
    %vm523 = vcmp.eq.s32.totalorder %v519, 1
    %vm524 = vcmp.eq.s32.totalorder %v520, 1
    %vm525 = vcmp.eq.s32.totalorder %v521, 1
    %vm526 = vcmp.eq.s32.totalorder %v522, 1
    %v527 = vsel %vm523, 0.0, %v518
    %v528 = vsel %vm524, 0.0, %v517
    %v529 = vsel %vm525, 0.0, %v516
    %v530 = vsel %vm526, 0.0, %v515
    %v531 = vadd.f32 %v527, %v445
    %v532 = vadd.f32 %v528, %v449
    %v533 = vadd.f32 %v529, %v455
    %v534 = vadd.f32 %v530, %v459
    %v535 = vrot.slane %v496, 1
    %v536 = vrot.slane %v499, 1
    %v537 = vrot.slane %v504, 1
    %v538 = vrot.slane %v507, 1
    %vm539 = vcmp.lt.s32.totalorder %v107, 7
    %v540 = vsel %vm539, %v537, %v538
    %v541 = vsel %vm539, %v536, %v537
    %v542 = vsel %vm539, %v535, %v536
    %v543 = vsel %vm539, %v538, %v535
    %v544 = vsel %vm163, 1, 0
    %v545 = vsel %vm164, 1, 0
    %v546 = vsel %vm165, 1, 0
    %v547 = vsel %vm166, 1, 0
    %vm548 = vcmp.eq.s32.totalorder %v544, 1
    %vm549 = vcmp.eq.s32.totalorder %v545, 1
    %vm550 = vcmp.eq.s32.totalorder %v546, 1
    %vm551 = vcmp.eq.s32.totalorder %v547, 1
    %v552 = vsel %vm548, 0.0, %v542
    %v553 = vsel %vm549, 0.0, %v541
    %v554 = vsel %vm550, 0.0, %v540
    %v555 = vsel %vm551, 0.0, %v543
    %v556 = vadd.f32 %v531, %v552
    %v557 = vadd.f32 %v532, %v553
    %v558 = vadd.f32 %v533, %v554
    %v559 = vadd.f32 %v534, %v555
    %v561 = vlaneseq
    %v562 = vshrl.u32 %v561, 7
    %v563 = vsub.s32 0, %v562
    %v564 = vrot.slane %v237, %v563
    %v566 = vadd.f32 %v556, %v564
    %v567 = vadd.f32 %v557, %v564
    %v568 = vadd.f32 %v558, %v564
    %v569 = vadd.f32 %v559, %v564
    %v570 = vsel %vm167, 1, 0
    %v571 = vsel %vm168, 1, 0
    %v572 = vsel %vm169, 1, 0
    %v573 = vsel %vm170, 1, 0
    %vm574 = vcmp.eq.s32.totalorder %v570, 1
    %vm575 = vcmp.eq.s32.totalorder %v571, 1
    %vm576 = vcmp.eq.s32.totalorder %v572, 1
    %vm577 = vcmp.eq.s32.totalorder %v573, 1
    %v578 = vsel %vm574, %v566, 0.0
    %v579 = vsel %vm575, %v567, 0.0
    %v580 = vsel %vm576, %v568, 0.0
    %v581 = vsel %vm577, %v569, 0.0
    %582 = vst [vmem:[#allocation13 + $0x8] sm:$0xff] %v578
    %583 = vst [vmem:[#allocation13 + $0x28] sm:$0xff] %v579
    %584 = vst [vmem:[#allocation13 + $0x48] sm:$0xff] %v580
    %585 = vst [vmem:[#allocation13 + $0x68] sm:$0xff] %v581
    %v586 = vadd.f32 %v578, %v579
    %v587 = vadd.f32 %v586, %v580
    %v588 = vadd.f32 %v587, %v581
    %v589 = vrot.slane %v588, 4
    %v590 = vadd.f32 %v588, %v589
    %v591 = vrot.slane %v590, 2
    %v592 = vadd.f32 %v590, %v591
    %v593 = vrot.slane %v592, 1
    %v594 = vadd.f32 %v592, %v593
    %595 = vst.msk [vmem:[#allocation2 + $0x1] sm:$0x1] %vm187, %v594
    %v596 = vmul.f32 %v578, %v578
    %v597 = vmul.f32 %v579, %v579
    %v598 = vmul.f32 %v580, %v580
    %v599 = vmul.f32 %v581, %v581
    %v600 = vadd.f32 %v596, %v597
    %v601 = vadd.f32 %v600, %v598
    %v602 = vadd.f32 %v601, %v599
    %v603 = vrot.slane %v602, 4
    %v604 = vadd.f32 %v602, %v603
    %v605 = vrot.slane %v604, 2
    %v606 = vadd.f32 %v604, %v605
    %v607 = vrot.slane %v606, 1
    %v608 = vadd.f32 %v606, %v607
    %609 = vst.msk [vmem:[#allocation3 + $0x1] sm:$0x1] %vm187, %v608
    %v610 = vld [vmem:[%s5] sm:$0x3]
    %v611 = vld [vmem:[%s6] sm:$0x3]
    %v612 = vld [vmem:[#allocation10] sm:$0xff]
    %v613 = vld [vmem:[#allocation10 + $0x8] sm:$0xf]
    %v614 = vld [vmem:[#allocation10 + $0xc] sm:$0xff]
    %v615 = vld [vmem:[#allocation10 + $0x14] sm:$0xf]
    %v616 = vld [vmem:[#allocation10 + $0x18] sm:$0xff]
    %v617 = vld [vmem:[#allocation10 + $0x20] sm:$0xf]
    %v618 = vld [vmem:[#allocation10 + $0x24] sm:$0xff]
    %v619 = vld [vmem:[#allocation10 + $0x2c] sm:$0xf]
    %v620 = vld [vmem:[#allocation10 + $0x30] sm:$0xff]
    %v621 = vld [vmem:[#allocation10 + $0x38] sm:$0xf]
    %v622 = vld [vmem:[#allocation10 + $0x3c] sm:$0xff]
    %v623 = vld [vmem:[#allocation10 + $0x44] sm:$0xf]
    %v624 = vld [vmem:[#allocation10 + $0x48] sm:$0xff]
    %v625 = vld [vmem:[#allocation10 + $0x50] sm:$0xf]
    %v626 = vld [vmem:[#allocation10 + $0x54] sm:$0xff]
    %v627 = vld [vmem:[#allocation10 + $0x5c] sm:$0xf]
    %v628 = vld [vmem:[#allocation10 + $0x60] sm:$0xff]
    %v629 = vld [vmem:[#allocation10 + $0x68] sm:$0xf]
    %v630 = vld [vmem:[#allocation10 + $0x6c] sm:$0xff]
    %v631 = vld [vmem:[#allocation10 + $0x74] sm:$0xf]
    %v632 = vld [vmem:[#allocation10 + $0x78] sm:$0xff]
    %v633 = vld [vmem:[#allocation10 + $0x80] sm:$0xf]
    %v634 = vld [vmem:[#allocation10 + $0x84] sm:$0xff]
    %v635 = vld [vmem:[#allocation10 + $0x8c] sm:$0xf]
    %v636 = vld [vmem:[#allocation10 + $0x90] sm:$0xff]
    %v637 = vld [vmem:[#allocation10 + $0x98] sm:$0xf]
    %v638 = vld [vmem:[#allocation10 + $0x9c] sm:$0xff]
    %v639 = vld [vmem:[#allocation10 + $0xa4] sm:$0xf]
    %v640 = vld [vmem:[#allocation10 + $0xa8] sm:$0xff]
    %v641 = vld [vmem:[#allocation10 + $0xb0] sm:$0xf]
    %v642 = vld [vmem:[#allocation10 + $0xb4] sm:$0xff]
    %v643 = vld [vmem:[#allocation10 + $0xbc] sm:$0xf]
    %v644 = vld [vmem:[#allocation10 + $0xc0] sm:$0xff]
    %v645 = vld [vmem:[#allocation10 + $0xc8] sm:$0xf]
    %v646 = vld [vmem:[#allocation10 + $0xcc] sm:$0xff]
    %v647 = vld [vmem:[#allocation10 + $0xd4] sm:$0xf]
    %v648 = vld [vmem:[#allocation10 + $0xd8] sm:$0xff]
    %v649 = vld [vmem:[#allocation10 + $0xe0] sm:$0xf]
    %v650 = vld [vmem:[#allocation10 + $0xe4] sm:$0xff]
    %v651 = vld [vmem:[#allocation10 + $0xec] sm:$0xf]
    %v652 = vld [vmem:[#allocation10 + $0xf0] sm:$0xff]
    %v653 = vld [vmem:[#allocation10 + $0xf8] sm:$0xf]
    %v654 = vld [vmem:[#allocation10 + $0xfc] sm:$0xff]
    %v655 = vld [vmem:[#allocation10 + $0x104] sm:$0xf]
    %v656 = vld [vmem:[#allocation10 + $0x108] sm:$0xff]
    %v657 = vld [vmem:[#allocation10 + $0x110] sm:$0xf]
    %v658 = vld [vmem:[#allocation10 + $0x114] sm:$0xff]
    %v659 = vld [vmem:[#allocation10 + $0x11c] sm:$0xf]
    %v660 = vld [vmem:[#allocation10 + $0x120] sm:$0xff]
    %v661 = vld [vmem:[#allocation10 + $0x128] sm:$0xf]
    %v662 = vld [vmem:[#allocation10 + $0x12c] sm:$0xff]
    %v663 = vld [vmem:[#allocation10 + $0x134] sm:$0xf]
    %v664 = vld [vmem:[#allocation10 + $0x138] sm:$0xff]
    %v665 = vld [vmem:[#allocation10 + $0x140] sm:$0xf]
    %v666 = vld [vmem:[#allocation10 + $0x144] sm:$0xff]
    %v667 = vld [vmem:[#allocation10 + $0x14c] sm:$0xf]
    %v668 = vld [vmem:[#allocation10 + $0x150] sm:$0xff]
    %v669 = vld [vmem:[#allocation10 + $0x158] sm:$0xf]
    %v670 = vld [vmem:[#allocation10 + $0x15c] sm:$0xff]
    %v671 = vld [vmem:[#allocation10 + $0x164] sm:$0xf]
    %v672 = vld [vmem:[#allocation10 + $0x168] sm:$0xff]
    %v673 = vld [vmem:[#allocation10 + $0x170] sm:$0xf]
    %v674 = vld [vmem:[#allocation10 + $0x174] sm:$0xff]
    %v675 = vld [vmem:[#allocation10 + $0x17c] sm:$0xf]
    %v676 = vld [vmem:[%s8] sm:$0x1]
    %v677 = vld [vmem:[#allocation13] sm:$0xff]
    %v678 = vld [vmem:[#allocation13 + $0x8] sm:$0xff]
    %v679 = vld [vmem:[#allocation13 + $0x20] sm:$0xff]
    %v680 = vld [vmem:[#allocation13 + $0x28] sm:$0xff]
    %v681 = vld [vmem:[#allocation13 + $0x40] sm:$0xff]
    %v682 = vld [vmem:[#allocation13 + $0x48] sm:$0xff]
    %v683 = vld [vmem:[#allocation13 + $0x60] sm:$0xff]
    %v684 = vld [vmem:[#allocation13 + $0x68] sm:$0xff]
    %v685 = vld [vmem:[#allocation2] sm:$0x3]
    %v686 = vld [vmem:[#allocation3] sm:$0x3]
    %v687 = vmul.f32 %v685, 0.03125
    %v688 = vmul.f32 %v686, 0.03125
    %v689 = vmul.f32 %v687, %v687
    %v690 = vsub.f32 %v688, %v689
    %v691 = vmax.f32 %v690, 0.0
    %v692 = vadd.f32 %v691, 1e-05
    %v693 = vrsqrt.pop %v692
    %v694 = vmul.f32 %v693, %v610
    %v695 = vmul.f32 %v687, %v694
    %v696 = vsub.f32 %v611, %v695
    %v698 = vlaneseq
    %v699 = vshrl.u32 %v698, 7
    %v700 = vsub.s32 0, %v699
    %v701 = vrot.slane %v694, %v700
    %v702 = vlaneseq
    %v703 = vshrl.u32 %v702, 7
    %v704 = vsub.s32 1, %v703
    %v705 = vrot.slane %v694, %v704
    %v708 = vmul.f32 %v677, %v701
    %v709 = vmul.f32 %v678, %v705
    %v710 = vmul.f32 %v679, %v701
    %v711 = vmul.f32 %v680, %v705
    %v712 = vmul.f32 %v681, %v701
    %v713 = vmul.f32 %v682, %v705
    %v714 = vmul.f32 %v683, %v701
    %v715 = vmul.f32 %v684, %v705
    %v717 = vlaneseq
    %v718 = vshrl.u32 %v717, 7
    %v719 = vsub.s32 0, %v718
    %v720 = vrot.slane %v696, %v719
    %v721 = vlaneseq
    %v722 = vshrl.u32 %v721, 7
    %v723 = vsub.s32 1, %v722
    %v724 = vrot.slane %v696, %v723
    %v727 = vadd.f32 %v708, %v720
    %v728 = vadd.f32 %v709, %v724
    %v729 = vadd.f32 %v710, %v720
    %v730 = vadd.f32 %v711, %v724
    %v731 = vadd.f32 %v712, %v720
    %v732 = vadd.f32 %v713, %v724
    %v733 = vadd.f32 %v714, %v720
    %v734 = vadd.f32 %v715, %v724
    %v735 = vmax.f32 %v727, 0.0
    %v736 = vmax.f32 %v728, 0.0
    %v737 = vmax.f32 %v729, 0.0
    %v738 = vmax.f32 %v730, 0.0
    %v739 = vmax.f32 %v731, 0.0
    %v740 = vmax.f32 %v732, 0.0
    %v741 = vmax.f32 %v733, 0.0
    %v742 = vmax.f32 %v734, 0.0
    %v743 = vpack.c.bf16 %v737, %v735
    %v744 = vpack.c.bf16 %v738, %v736
    %v745 = vpack.c.bf16 %v741, %v739
    %v746 = vpack.c.bf16 %v742, %v740
    %v811 = vunpack.c.l.b16 %v612
    %v812 = vunpack.c.h.b16 %v612
    %v813 = vunpack.c.l.b16 %v613
    %v814 = vunpack.c.l.b16 %v614
    %v815 = vunpack.c.h.b16 %v614
    %v816 = vunpack.c.l.b16 %v615
    %v817 = vunpack.c.l.b16 %v616
    %v818 = vunpack.c.h.b16 %v616
    %v819 = vunpack.c.l.b16 %v617
    %v820 = vunpack.c.l.b16 %v618
    %v821 = vunpack.c.h.b16 %v618
    %v822 = vunpack.c.l.b16 %v619
    %v823 = vunpack.c.l.b16 %v620
    %v824 = vunpack.c.h.b16 %v620
    %v825 = vunpack.c.l.b16 %v621
    %v826 = vunpack.c.l.b16 %v622
    %v827 = vunpack.c.h.b16 %v622
    %v828 = vunpack.c.l.b16 %v623
    %v829 = vunpack.c.l.b16 %v624
    %v830 = vunpack.c.h.b16 %v624
    %v831 = vunpack.c.l.b16 %v625
    %v832 = vunpack.c.l.b16 %v626
    %v833 = vunpack.c.h.b16 %v626
    %v834 = vunpack.c.l.b16 %v627
    %v835 = vunpack.c.l.b16 %v628
    %v836 = vunpack.c.h.b16 %v628
    %v837 = vunpack.c.l.b16 %v629
    %v838 = vunpack.c.l.b16 %v630
    %v839 = vunpack.c.h.b16 %v630
    %v840 = vunpack.c.l.b16 %v631
    %v841 = vunpack.c.l.b16 %v632
    %v842 = vunpack.c.h.b16 %v632
    %v843 = vunpack.c.l.b16 %v633
    %v844 = vunpack.c.l.b16 %v634
    %v845 = vunpack.c.h.b16 %v634
    %v846 = vunpack.c.l.b16 %v635
    %v847 = vunpack.c.l.b16 %v636
    %v848 = vunpack.c.h.b16 %v636
    %v849 = vunpack.c.l.b16 %v637
    %v850 = vunpack.c.l.b16 %v638
    %v851 = vunpack.c.h.b16 %v638
    %v852 = vunpack.c.l.b16 %v639
    %v853 = vunpack.c.l.b16 %v640
    %v854 = vunpack.c.h.b16 %v640
    %v855 = vunpack.c.l.b16 %v641
    %v856 = vunpack.c.l.b16 %v642
    %v857 = vunpack.c.h.b16 %v642
    %v858 = vunpack.c.l.b16 %v643
    %v859 = vunpack.c.l.b16 %v644
    %v860 = vunpack.c.h.b16 %v644
    %v861 = vunpack.c.l.b16 %v645
    %v862 = vunpack.c.l.b16 %v646
    %v863 = vunpack.c.h.b16 %v646
    %v864 = vunpack.c.l.b16 %v647
    %v865 = vunpack.c.l.b16 %v648
    %v866 = vunpack.c.h.b16 %v648
    %v867 = vunpack.c.l.b16 %v649
    %v868 = vunpack.c.l.b16 %v650
    %v869 = vunpack.c.h.b16 %v650
    %v870 = vunpack.c.l.b16 %v651
    %v871 = vunpack.c.l.b16 %v652
    %v872 = vunpack.c.h.b16 %v652
    %v873 = vunpack.c.l.b16 %v653
    %v874 = vunpack.c.l.b16 %v654
    %v875 = vunpack.c.h.b16 %v654
    %v876 = vunpack.c.l.b16 %v655
    %v877 = vunpack.c.l.b16 %v656
    %v878 = vunpack.c.h.b16 %v656
    %v879 = vunpack.c.l.b16 %v657
    %v880 = vunpack.c.l.b16 %v658
    %v881 = vunpack.c.h.b16 %v658
    %v882 = vunpack.c.l.b16 %v659
    %v883 = vunpack.c.l.b16 %v660
    %v884 = vunpack.c.h.b16 %v660
    %v885 = vunpack.c.l.b16 %v661
    %v886 = vunpack.c.l.b16 %v662
    %v887 = vunpack.c.h.b16 %v662
    %v888 = vunpack.c.l.b16 %v663
    %v889 = vunpack.c.l.b16 %v664
    %v890 = vunpack.c.h.b16 %v664
    %v891 = vunpack.c.l.b16 %v665
    %v892 = vunpack.c.l.b16 %v666
    %v893 = vunpack.c.h.b16 %v666
    %v894 = vunpack.c.l.b16 %v667
    %v895 = vunpack.c.l.b16 %v668
    %v896 = vunpack.c.h.b16 %v668
    %v897 = vunpack.c.l.b16 %v669
    %v898 = vunpack.c.l.b16 %v670
    %v899 = vunpack.c.h.b16 %v670
    %v900 = vunpack.c.l.b16 %v671
    %v901 = vunpack.c.l.b16 %v672
    %v902 = vunpack.c.h.b16 %v672
    %v903 = vunpack.c.l.b16 %v673
    %v904 = vunpack.c.l.b16 %v674
    %v905 = vunpack.c.h.b16 %v674
    %v906 = vunpack.c.l.b16 %v675
    %v907 = vpack.c.b16 %v814, %v811
    %v908 = vpack.c.b16 %v815, %v812
    %v909 = vpack.c.b16 %v816, %v813
    %v910 = vpack.c.b16 %v820, %v817
    %v911 = vpack.c.b16 %v821, %v818
    %v912 = vpack.c.b16 %v822, %v819
    %v913 = vpack.c.b16 %v826, %v823
    %v914 = vpack.c.b16 %v827, %v824
    %v915 = vpack.c.b16 %v828, %v825
    %v916 = vpack.c.b16 %v832, %v829
    %v917 = vpack.c.b16 %v833, %v830
    %v918 = vpack.c.b16 %v834, %v831
    %v919 = vpack.c.b16 %v838, %v835
    %v920 = vpack.c.b16 %v839, %v836
    %v921 = vpack.c.b16 %v840, %v837
    %v922 = vpack.c.b16 %v844, %v841
    %v923 = vpack.c.b16 %v845, %v842
    %v924 = vpack.c.b16 %v846, %v843
    %v925 = vpack.c.b16 %v850, %v847
    %v926 = vpack.c.b16 %v851, %v848
    %v927 = vpack.c.b16 %v852, %v849
    %v928 = vpack.c.b16 %v856, %v853
    %v929 = vpack.c.b16 %v857, %v854
    %v930 = vpack.c.b16 %v858, %v855
    %v931 = vpack.c.b16 %v862, %v859
    %v932 = vpack.c.b16 %v863, %v860
    %v933 = vpack.c.b16 %v864, %v861
    %v934 = vpack.c.b16 %v868, %v865
    %v935 = vpack.c.b16 %v869, %v866
    %v936 = vpack.c.b16 %v870, %v867
    %v937 = vpack.c.b16 %v874, %v871
    %v938 = vpack.c.b16 %v875, %v872
    %v939 = vpack.c.b16 %v876, %v873
    %v940 = vpack.c.b16 %v880, %v877
    %v941 = vpack.c.b16 %v881, %v878
    %v942 = vpack.c.b16 %v882, %v879
    %v943 = vpack.c.b16 %v886, %v883
    %v944 = vpack.c.b16 %v887, %v884
    %v945 = vpack.c.b16 %v888, %v885
    %v946 = vpack.c.b16 %v892, %v889
    %v947 = vpack.c.b16 %v893, %v890
    %v948 = vpack.c.b16 %v894, %v891
    %v949 = vpack.c.b16 %v898, %v895
    %v950 = vpack.c.b16 %v899, %v896
    %v951 = vpack.c.b16 %v900, %v897
    %v952 = vpack.c.b16 %v904, %v901
    %v953 = vpack.c.b16 %v905, %v902
    %v954 = vpack.c.b16 %v906, %v903
    %1003 = vmatprep.subr.bf16.mxu0 %v908
    %1004 = vmatpush1.bf16.msra.mxu0 %v907
    %1005 = vmatprep.subr.bf16.mxu0 %v911
    %1006 = vmatpush1.bf16.msra.mxu0 %v910
    %1007 = vmatprep.subr.bf16.mxu0 %v914
    %1008 = vmatpush1.bf16.msra.mxu0 %v913
    %1009 = vmatprep.subr.bf16.mxu0 %v917
    %1010 = vmatpush1.bf16.msra.mxu0 %v916
    %1011 = vmatprep.subr.bf16.mxu0 %v920
    %1012 = vmatpush1.bf16.msra.mxu0 %v919
    %1013 = vmatprep.subr.bf16.mxu0 %v923
    %1014 = vmatpush1.bf16.msra.mxu0 %v922
    %1015 = vmatprep.subr.bf16.mxu0 %v926
    %1016 = vmatpush1.bf16.msra.mxu0 %v925
    %1017 = vmatprep.subr.bf16.mxu0 %v929
    %1018 = vmatpush1.bf16.msra.mxu0 %v928
    %1019 = vmatprep.subr.bf16.mxu0 %v932
    %1020 = vmatpush1.bf16.msra.mxu0 %v931
    %1021 = vmatprep.subr.bf16.mxu0 %v935
    %1022 = vmatpush1.bf16.msra.mxu0 %v934
    %1023 = vmatprep.subr.bf16.mxu0 %v938
    %1024 = vmatpush1.bf16.msra.mxu0 %v937
    %1025 = vmatprep.subr.bf16.mxu0 %v941
    %1026 = vmatpush1.bf16.msra.mxu0 %v940
    %1027 = vmatprep.subr.bf16.mxu0 %v944
    %1028 = vmatpush1.bf16.msra.mxu0 %v943
    %1029 = vmatprep.subr.bf16.mxu0 %v947
    %1030 = vmatpush1.bf16.msra.mxu0 %v946
    %1031 = vmatprep.subr.bf16.mxu0 %v950
    %1032 = vmatpush1.bf16.msra.mxu0 %v949
    %1033 = vmatprep.subr.bf16.mxu0 %v953
    %1034 = vmatpush1.bf16.msra.mxu0 %v952
    %1035 = vmatprep.mubr.bf16.mxu0 %v744
    %1036 = vmatmul.mubr.bf16.gmra.mrb[0].mxu0 %v743
    %v1037 = vpop.f32.mrb[0].mxu0
    %v1038 = vadd.f32 0.0, %v1037
    %v1039 = vpop.f32.mrb[0].mxu0
    %v1040 = vadd.f32 0.0, %v1039
    %v1041 = vpop.f32.mrb[0].mxu0
    %v1042 = vadd.f32 0.0, %v1041
    %v1043 = vpop.f32.mrb[0].mxu0
    %v1044 = vadd.f32 0.0, %v1043
    %1045 = vmatprep.mubr.bf16.mxu0 %v746
    %1046 = vmatmul.mubr.bf16.gmra.mrb[0].mxu0 %v745
    %v1047 = vpop.f32.mrb[0].mxu0
    %v1048 = vadd.f32 0.0, %v1047
    %v1049 = vpop.f32.mrb[0].mxu0
    %v1050 = vadd.f32 0.0, %v1049
    %v1051 = vpop.f32.mrb[0].mxu0
    %v1052 = vadd.f32 0.0, %v1051
    %v1053 = vpop.f32.mrb[0].mxu0
    %v1054 = vadd.f32 0.0, %v1053
    %1055 = vdwg.mxu0
    %1056 = vmatprep.subr.bf16.mxu0 0
    %1057 = vmatpush1.bf16.msra.mxu0 %v909
    %1058 = vmatprep.subr.bf16.mxu0 0
    %1059 = vmatpush1.bf16.msra.mxu0 %v912
    %1060 = vmatprep.subr.bf16.mxu0 0
    %1061 = vmatpush1.bf16.msra.mxu0 %v915
    %1062 = vmatprep.subr.bf16.mxu0 0
    %1063 = vmatpush1.bf16.msra.mxu0 %v918
    %1064 = vmatprep.subr.bf16.mxu0 0
    %1065 = vmatpush1.bf16.msra.mxu0 %v921
    %1066 = vmatprep.subr.bf16.mxu0 0
    %1067 = vmatpush1.bf16.msra.mxu0 %v924
    %1068 = vmatprep.subr.bf16.mxu0 0
    %1069 = vmatpush1.bf16.msra.mxu0 %v927
    %1070 = vmatprep.subr.bf16.mxu0 0
    %1071 = vmatpush1.bf16.msra.mxu0 %v930
    %1072 = vmatprep.subr.bf16.mxu0 0
    %1073 = vmatpush1.bf16.msra.mxu0 %v933
    %1074 = vmatprep.subr.bf16.mxu0 0
    %1075 = vmatpush1.bf16.msra.mxu0 %v936
    %1076 = vmatprep.subr.bf16.mxu0 0
    %1077 = vmatpush1.bf16.msra.mxu0 %v939
    %1078 = vmatprep.subr.bf16.mxu0 0
    %1079 = vmatpush1.bf16.msra.mxu0 %v942
    %1080 = vmatprep.subr.bf16.mxu0 0
    %1081 = vmatpush1.bf16.msra.mxu0 %v945
    %1082 = vmatprep.subr.bf16.mxu0 0
    %1083 = vmatpush1.bf16.msra.mxu0 %v948
    %1084 = vmatprep.subr.bf16.mxu0 0
    %1085 = vmatpush1.bf16.msra.mxu0 %v951
    %1086 = vmatprep.subr.bf16.mxu0 0
    %1087 = vmatpush1.bf16.msra.mxu0 %v954
    %1088 = vmatprep.mubr.bf16.mxu0 %v744
    %1089 = vmatmul.mubr.bf16.gmra.mrb[0].mxu0 %v743
    %v1090 = vpop.f32.mrb[0].mxu0
    %v1091 = vadd.f32 0.0, %v1090
    %v1092 = vpop.f32.mrb[0].mxu0
    %v1093 = vpop.f32.mrb[0].mxu0
    %v1094 = vadd.f32 0.0, %v1093
    %v1095 = vpop.f32.mrb[0].mxu0
    %1096 = vmatprep.mubr.bf16.mxu0 %v746
    %1097 = vmatmul.mubr.bf16.gmra.mrb[0].mxu0 %v745
    %v1098 = vpop.f32.mrb[0].mxu0
    %v1099 = vadd.f32 0.0, %v1098
    %v1100 = vpop.f32.mrb[0].mxu0
    %v1101 = vpop.f32.mrb[0].mxu0
    %v1102 = vadd.f32 0.0, %v1101
    %v1103 = vpop.f32.mrb[0].mxu0
    %1104 = vdwg.mxu0
    %v1105 = vrot.slane %v1038, 7
    %v1106 = vrot.slane %v1042, 7
    %v1107 = vrot.slane %v1048, 7
    %v1108 = vrot.slane %v1052, 7
    %v1109 = vsel %vm514, %v1107, %v1108
    %v1110 = vsel %vm514, %v1106, %v1107
    %v1111 = vsel %vm514, %v1105, %v1106
    %v1112 = vsel %vm514, %v1108, %v1105
    %v1113 = vsel %vm523, 0.0, %v1112
    %v1114 = vsel %vm524, 0.0, %v1111
    %v1115 = vsel %vm525, 0.0, %v1110
    %v1116 = vsel %vm526, 0.0, %v1109
    %v1117 = vadd.f32 %v1113, %v1040
    %v1118 = vadd.f32 %v1114, %v1044
    %v1119 = vadd.f32 %v1115, %v1050
    %v1120 = vadd.f32 %v1116, %v1054
    %v1121 = vrot.slane %v1091, 1
    %v1122 = vrot.slane %v1094, 1
    %v1123 = vrot.slane %v1099, 1
    %v1124 = vrot.slane %v1102, 1
    %v1125 = vsel %vm539, %v1123, %v1124
    %v1126 = vsel %vm539, %v1122, %v1123
    %v1127 = vsel %vm539, %v1121, %v1122
    %v1128 = vsel %vm539, %v1124, %v1121
    %v1129 = vsel %vm548, 0.0, %v1127
    %v1130 = vsel %vm549, 0.0, %v1126
    %v1131 = vsel %vm550, 0.0, %v1125
    %v1132 = vsel %vm551, 0.0, %v1128
    %v1133 = vadd.f32 %v1117, %v1129
    %v1134 = vadd.f32 %v1118, %v1130
    %v1135 = vadd.f32 %v1119, %v1131
    %v1136 = vadd.f32 %v1120, %v1132
    %v1138 = vlaneseq
    %v1139 = vshrl.u32 %v1138, 7
    %v1140 = vsub.s32 0, %v1139
    %v1141 = vrot.slane %v676, %v1140
    %v1143 = vadd.f32 %v1133, %v1141
    %v1144 = vadd.f32 %v1134, %v1141
    %v1145 = vadd.f32 %v1135, %v1141
    %v1146 = vadd.f32 %v1136, %v1141
    %v1147 = vsel %vm574, %v1143, 0.0
    %v1148 = vsel %vm575, %v1144, 0.0
    %v1149 = vsel %vm576, %v1145, 0.0
    %v1150 = vsel %vm577, %v1146, 0.0
    %1151 = vst [vmem:[#allocation13 + $0x10] sm:$0xff] %v1147
    %1152 = vst [vmem:[#allocation13 + $0x30] sm:$0xff] %v1148
    %1153 = vst [vmem:[#allocation13 + $0x50] sm:$0xff] %v1149
    %1154 = vst [vmem:[#allocation13 + $0x70] sm:$0xff] %v1150
    %v1155 = vadd.f32 %v1147, %v1148
    %v1156 = vadd.f32 %v1155, %v1149
    %v1157 = vadd.f32 %v1156, %v1150
    %v1158 = vrot.slane %v1157, 4
    %v1159 = vadd.f32 %v1157, %v1158
    %v1160 = vrot.slane %v1159, 2
    %v1161 = vadd.f32 %v1159, %v1160
    %v1162 = vrot.slane %v1161, 1
    %v1163 = vadd.f32 %v1161, %v1162
    %1164 = vst.msk [vmem:[#allocation2 + $0x2] sm:$0x1] %vm187, %v1163
    %v1165 = vmul.f32 %v1147, %v1147
    %v1166 = vmul.f32 %v1148, %v1148
    %v1167 = vmul.f32 %v1149, %v1149
    %v1168 = vmul.f32 %v1150, %v1150
    %v1169 = vadd.f32 %v1165, %v1166
    %v1170 = vadd.f32 %v1169, %v1167
    %v1171 = vadd.f32 %v1170, %v1168
    %v1172 = vrot.slane %v1171, 4
    %v1173 = vadd.f32 %v1171, %v1172
    %v1174 = vrot.slane %v1173, 2
    %v1175 = vadd.f32 %v1173, %v1174
    %v1176 = vrot.slane %v1175, 1
    %v1177 = vadd.f32 %v1175, %v1176
    %1178 = vst.msk [vmem:[#allocation3 + $0x2] sm:$0x1] %vm187, %v1177
    %v1179 = vld [vmem:[%s9] sm:$0x7]
    %v1180 = vld [vmem:[%s10] sm:$0x7]
    %v1181 = vld [vmem:[#allocation11] sm:$0xff]
    %v1182 = vld [vmem:[#allocation11 + $0x8] sm:$0xf]
    %v1183 = vld [vmem:[#allocation11 + $0xc] sm:$0xff]
    %v1184 = vld [vmem:[#allocation11 + $0x14] sm:$0xf]
    %v1185 = vld [vmem:[#allocation11 + $0x18] sm:$0xff]
    %v1186 = vld [vmem:[#allocation11 + $0x20] sm:$0xf]
    %v1187 = vld [vmem:[#allocation11 + $0x24] sm:$0xff]
    %v1188 = vld [vmem:[#allocation11 + $0x2c] sm:$0xf]
    %v1189 = vld [vmem:[#allocation11 + $0x30] sm:$0xff]
    %v1190 = vld [vmem:[#allocation11 + $0x38] sm:$0xf]
    %v1191 = vld [vmem:[#allocation11 + $0x3c] sm:$0xff]
    %v1192 = vld [vmem:[#allocation11 + $0x44] sm:$0xf]
    %v1193 = vld [vmem:[#allocation11 + $0x48] sm:$0xff]
    %v1194 = vld [vmem:[#allocation11 + $0x50] sm:$0xf]
    %v1195 = vld [vmem:[#allocation11 + $0x54] sm:$0xff]
    %v1196 = vld [vmem:[#allocation11 + $0x5c] sm:$0xf]
    %v1197 = vld [vmem:[#allocation11 + $0x60] sm:$0xff]
    %v1198 = vld [vmem:[#allocation11 + $0x68] sm:$0xf]
    %v1199 = vld [vmem:[#allocation11 + $0x6c] sm:$0xff]
    %v1200 = vld [vmem:[#allocation11 + $0x74] sm:$0xf]
    %v1201 = vld [vmem:[#allocation11 + $0x78] sm:$0xff]
    %v1202 = vld [vmem:[#allocation11 + $0x80] sm:$0xf]
    %v1203 = vld [vmem:[#allocation11 + $0x84] sm:$0xff]
    %v1204 = vld [vmem:[#allocation11 + $0x8c] sm:$0xf]
    %v1205 = vld [vmem:[#allocation11 + $0x90] sm:$0xff]
    %v1206 = vld [vmem:[#allocation11 + $0x98] sm:$0xf]
    %v1207 = vld [vmem:[#allocation11 + $0x9c] sm:$0xff]
    %v1208 = vld [vmem:[#allocation11 + $0xa4] sm:$0xf]
    %v1209 = vld [vmem:[#allocation11 + $0xa8] sm:$0xff]
    %v1210 = vld [vmem:[#allocation11 + $0xb0] sm:$0xf]
    %v1211 = vld [vmem:[#allocation11 + $0xb4] sm:$0xff]
    %v1212 = vld [vmem:[#allocation11 + $0xbc] sm:$0xf]
    %v1213 = vld [vmem:[#allocation11 + $0xc0] sm:$0xff]
    %v1214 = vld [vmem:[#allocation11 + $0xc8] sm:$0xf]
    %v1215 = vld [vmem:[#allocation11 + $0xcc] sm:$0xff]
    %v1216 = vld [vmem:[#allocation11 + $0xd4] sm:$0xf]
    %v1217 = vld [vmem:[#allocation11 + $0xd8] sm:$0xff]
    %v1218 = vld [vmem:[#allocation11 + $0xe0] sm:$0xf]
    %v1219 = vld [vmem:[#allocation11 + $0xe4] sm:$0xff]
    %v1220 = vld [vmem:[#allocation11 + $0xec] sm:$0xf]
    %v1221 = vld [vmem:[#allocation11 + $0xf0] sm:$0xff]
    %v1222 = vld [vmem:[#allocation11 + $0xf8] sm:$0xf]
    %v1223 = vld [vmem:[#allocation11 + $0xfc] sm:$0xff]
    %v1224 = vld [vmem:[#allocation11 + $0x104] sm:$0xf]
    %v1225 = vld [vmem:[#allocation11 + $0x108] sm:$0xff]
    %v1226 = vld [vmem:[#allocation11 + $0x110] sm:$0xf]
    %v1227 = vld [vmem:[#allocation11 + $0x114] sm:$0xff]
    %v1228 = vld [vmem:[#allocation11 + $0x11c] sm:$0xf]
    %v1229 = vld [vmem:[#allocation11 + $0x120] sm:$0xff]
    %v1230 = vld [vmem:[#allocation11 + $0x128] sm:$0xf]
    %v1231 = vld [vmem:[#allocation11 + $0x12c] sm:$0xff]
    %v1232 = vld [vmem:[#allocation11 + $0x134] sm:$0xf]
    %v1233 = vld [vmem:[#allocation11 + $0x138] sm:$0xff]
    %v1234 = vld [vmem:[#allocation11 + $0x140] sm:$0xf]
    %v1235 = vld [vmem:[#allocation11 + $0x144] sm:$0xff]
    %v1236 = vld [vmem:[#allocation11 + $0x14c] sm:$0xf]
    %v1237 = vld [vmem:[#allocation11 + $0x150] sm:$0xff]
    %v1238 = vld [vmem:[#allocation11 + $0x158] sm:$0xf]
    %v1239 = vld [vmem:[#allocation11 + $0x15c] sm:$0xff]
    %v1240 = vld [vmem:[#allocation11 + $0x164] sm:$0xf]
    %v1241 = vld [vmem:[#allocation11 + $0x168] sm:$0xff]
    %v1242 = vld [vmem:[#allocation11 + $0x170] sm:$0xf]
    %v1243 = vld [vmem:[#allocation11 + $0x174] sm:$0xff]
    %v1244 = vld [vmem:[#allocation11 + $0x17c] sm:$0xf]
    %v1245 = vld [vmem:[#allocation11 + $0x180] sm:$0xff]
    %v1246 = vld [vmem:[#allocation11 + $0x188] sm:$0xf]
    %v1247 = vld [vmem:[#allocation11 + $0x18c] sm:$0xff]
    %v1248 = vld [vmem:[#allocation11 + $0x194] sm:$0xf]
    %v1249 = vld [vmem:[#allocation11 + $0x198] sm:$0xff]
    %v1250 = vld [vmem:[#allocation11 + $0x1a0] sm:$0xf]
    %v1251 = vld [vmem:[#allocation11 + $0x1a4] sm:$0xff]
    %v1252 = vld [vmem:[#allocation11 + $0x1ac] sm:$0xf]
    %v1253 = vld [vmem:[#allocation11 + $0x1b0] sm:$0xff]
    %v1254 = vld [vmem:[#allocation11 + $0x1b8] sm:$0xf]
    %v1255 = vld [vmem:[#allocation11 + $0x1bc] sm:$0xff]
    %v1256 = vld [vmem:[#allocation11 + $0x1c4] sm:$0xf]
    %v1257 = vld [vmem:[#allocation11 + $0x1c8] sm:$0xff]
    %v1258 = vld [vmem:[#allocation11 + $0x1d0] sm:$0xf]
    %v1259 = vld [vmem:[#allocation11 + $0x1d4] sm:$0xff]
    %v1260 = vld [vmem:[#allocation11 + $0x1dc] sm:$0xf]
    %v1261 = vld [vmem:[#allocation11 + $0x1e0] sm:$0xff]
    %v1262 = vld [vmem:[#allocation11 + $0x1e8] sm:$0xf]
    %v1263 = vld [vmem:[#allocation11 + $0x1ec] sm:$0xff]
    %v1264 = vld [vmem:[#allocation11 + $0x1f4] sm:$0xf]
    %v1265 = vld [vmem:[#allocation11 + $0x1f8] sm:$0xff]
    %v1266 = vld [vmem:[#allocation11 + $0x200] sm:$0xf]
    %v1267 = vld [vmem:[#allocation11 + $0x204] sm:$0xff]
    %v1268 = vld [vmem:[#allocation11 + $0x20c] sm:$0xf]
    %v1269 = vld [vmem:[#allocation11 + $0x210] sm:$0xff]
    %v1270 = vld [vmem:[#allocation11 + $0x218] sm:$0xf]
    %v1271 = vld [vmem:[#allocation11 + $0x21c] sm:$0xff]
    %v1272 = vld [vmem:[#allocation11 + $0x224] sm:$0xf]
    %v1273 = vld [vmem:[#allocation11 + $0x228] sm:$0xff]
    %v1274 = vld [vmem:[#allocation11 + $0x230] sm:$0xf]
    %v1275 = vld [vmem:[#allocation11 + $0x234] sm:$0xff]
    %v1276 = vld [vmem:[#allocation11 + $0x23c] sm:$0xf]
    %v1277 = vld [vmem:[%s12] sm:$0x1]
    %v1278 = vld [vmem:[#allocation13] sm:$0xff]
    %v1279 = vld [vmem:[#allocation13 + $0x8] sm:$0xff]
    %v1280 = vld [vmem:[#allocation13 + $0x10] sm:$0xff]
    %v1281 = vld [vmem:[#allocation13 + $0x20] sm:$0xff]
    %v1282 = vld [vmem:[#allocation13 + $0x28] sm:$0xff]
    %v1283 = vld [vmem:[#allocation13 + $0x30] sm:$0xff]
    %v1284 = vld [vmem:[#allocation13 + $0x40] sm:$0xff]
    %v1285 = vld [vmem:[#allocation13 + $0x48] sm:$0xff]
    %v1286 = vld [vmem:[#allocation13 + $0x50] sm:$0xff]
    %v1287 = vld [vmem:[#allocation13 + $0x60] sm:$0xff]
    %v1288 = vld [vmem:[#allocation13 + $0x68] sm:$0xff]
    %v1289 = vld [vmem:[#allocation13 + $0x70] sm:$0xff]
    %v1290 = vld [vmem:[#allocation2] sm:$0x7]
    %v1291 = vld [vmem:[#allocation3] sm:$0x7]
    %v1292 = vmul.f32 %v1290, 0.03125
    %v1293 = vmul.f32 %v1291, 0.03125
    %v1294 = vmul.f32 %v1292, %v1292
    %v1295 = vsub.f32 %v1293, %v1294
    %v1296 = vmax.f32 %v1295, 0.0
    %v1297 = vadd.f32 %v1296, 1e-05
    %v1298 = vrsqrt.pop %v1297
    %v1299 = vmul.f32 %v1298, %v1179
    %v1300 = vmul.f32 %v1292, %v1299
    %v1301 = vsub.f32 %v1180, %v1300
    %v1303 = vlaneseq
    %v1304 = vshrl.u32 %v1303, 7
    %v1305 = vsub.s32 0, %v1304
    %v1306 = vrot.slane %v1299, %v1305
    %v1307 = vlaneseq
    %v1308 = vshrl.u32 %v1307, 7
    %v1309 = vsub.s32 1, %v1308
    %v1310 = vrot.slane %v1299, %v1309
    %v1311 = vlaneseq
    %v1312 = vshrl.u32 %v1311, 7
    %v1313 = vsub.s32 2, %v1312
    %v1314 = vrot.slane %v1299, %v1313
    %v1318 = vmul.f32 %v1278, %v1306
    %v1319 = vmul.f32 %v1279, %v1310
    %v1320 = vmul.f32 %v1280, %v1314
    %v1321 = vmul.f32 %v1281, %v1306
    %v1322 = vmul.f32 %v1282, %v1310
    %v1323 = vmul.f32 %v1283, %v1314
    %v1324 = vmul.f32 %v1284, %v1306
    %v1325 = vmul.f32 %v1285, %v1310
    %v1326 = vmul.f32 %v1286, %v1314
    %v1327 = vmul.f32 %v1287, %v1306
    %v1328 = vmul.f32 %v1288, %v1310
    %v1329 = vmul.f32 %v1289, %v1314
    %v1331 = vlaneseq
    %v1332 = vshrl.u32 %v1331, 7
    %v1333 = vsub.s32 0, %v1332
    %v1334 = vrot.slane %v1301, %v1333
    %v1335 = vlaneseq
    %v1336 = vshrl.u32 %v1335, 7
    %v1337 = vsub.s32 1, %v1336
    %v1338 = vrot.slane %v1301, %v1337
    %v1339 = vlaneseq
    %v1340 = vshrl.u32 %v1339, 7
    %v1341 = vsub.s32 2, %v1340
    %v1342 = vrot.slane %v1301, %v1341
    %v1346 = vadd.f32 %v1318, %v1334
    %v1347 = vadd.f32 %v1319, %v1338
    %v1348 = vadd.f32 %v1320, %v1342
    %v1349 = vadd.f32 %v1321, %v1334
    %v1350 = vadd.f32 %v1322, %v1338
    %v1351 = vadd.f32 %v1323, %v1342
    %v1352 = vadd.f32 %v1324, %v1334
    %v1353 = vadd.f32 %v1325, %v1338
    %v1354 = vadd.f32 %v1326, %v1342
    %v1355 = vadd.f32 %v1327, %v1334
    %v1356 = vadd.f32 %v1328, %v1338
    %v1357 = vadd.f32 %v1329, %v1342
    %v1358 = vmax.f32 %v1346, 0.0
    %v1359 = vmax.f32 %v1347, 0.0
    %v1360 = vmax.f32 %v1348, 0.0
    %v1361 = vmax.f32 %v1349, 0.0
    %v1362 = vmax.f32 %v1350, 0.0
    %v1363 = vmax.f32 %v1351, 0.0
    %v1364 = vmax.f32 %v1352, 0.0
    %v1365 = vmax.f32 %v1353, 0.0
    %v1366 = vmax.f32 %v1354, 0.0
    %v1367 = vmax.f32 %v1355, 0.0
    %v1368 = vmax.f32 %v1356, 0.0
    %v1369 = vmax.f32 %v1357, 0.0
    %v1370 = vpack.c.bf16 %v1361, %v1358
    %v1371 = vpack.c.bf16 %v1362, %v1359
    %v1372 = vpack.c.bf16 %v1363, %v1360
    %v1373 = vpack.c.bf16 %v1367, %v1364
    %v1374 = vpack.c.bf16 %v1368, %v1365
    %v1375 = vpack.c.bf16 %v1369, %v1366
    %v1472 = vunpack.c.l.b16 %v1181
    %v1473 = vunpack.c.h.b16 %v1181
    %v1474 = vunpack.c.l.b16 %v1182
    %v1475 = vunpack.c.l.b16 %v1183
    %v1476 = vunpack.c.h.b16 %v1183
    %v1477 = vunpack.c.l.b16 %v1184
    %v1478 = vunpack.c.l.b16 %v1185
    %v1479 = vunpack.c.h.b16 %v1185
    %v1480 = vunpack.c.l.b16 %v1186
    %v1481 = vunpack.c.l.b16 %v1187
    %v1482 = vunpack.c.h.b16 %v1187
    %v1483 = vunpack.c.l.b16 %v1188
    %v1484 = vunpack.c.l.b16 %v1189
    %v1485 = vunpack.c.h.b16 %v1189
    %v1486 = vunpack.c.l.b16 %v1190
    %v1487 = vunpack.c.l.b16 %v1191
    %v1488 = vunpack.c.h.b16 %v1191
    %v1489 = vunpack.c.l.b16 %v1192
    %v1490 = vunpack.c.l.b16 %v1193
    %v1491 = vunpack.c.h.b16 %v1193
    %v1492 = vunpack.c.l.b16 %v1194
    %v1493 = vunpack.c.l.b16 %v1195
    %v1494 = vunpack.c.h.b16 %v1195
    %v1495 = vunpack.c.l.b16 %v1196
    %v1496 = vunpack.c.l.b16 %v1197
    %v1497 = vunpack.c.h.b16 %v1197
    %v1498 = vunpack.c.l.b16 %v1198
    %v1499 = vunpack.c.l.b16 %v1199
    %v1500 = vunpack.c.h.b16 %v1199
    %v1501 = vunpack.c.l.b16 %v1200
    %v1502 = vunpack.c.l.b16 %v1201
    %v1503 = vunpack.c.h.b16 %v1201
    %v1504 = vunpack.c.l.b16 %v1202
    %v1505 = vunpack.c.l.b16 %v1203
    %v1506 = vunpack.c.h.b16 %v1203
    %v1507 = vunpack.c.l.b16 %v1204
    %v1508 = vunpack.c.l.b16 %v1205
    %v1509 = vunpack.c.h.b16 %v1205
    %v1510 = vunpack.c.l.b16 %v1206
    %v1511 = vunpack.c.l.b16 %v1207
    %v1512 = vunpack.c.h.b16 %v1207
    %v1513 = vunpack.c.l.b16 %v1208
    %v1514 = vunpack.c.l.b16 %v1209
    %v1515 = vunpack.c.h.b16 %v1209
    %v1516 = vunpack.c.l.b16 %v1210
    %v1517 = vunpack.c.l.b16 %v1211
    %v1518 = vunpack.c.h.b16 %v1211
    %v1519 = vunpack.c.l.b16 %v1212
    %v1520 = vunpack.c.l.b16 %v1213
    %v1521 = vunpack.c.h.b16 %v1213
    %v1522 = vunpack.c.l.b16 %v1214
    %v1523 = vunpack.c.l.b16 %v1215
    %v1524 = vunpack.c.h.b16 %v1215
    %v1525 = vunpack.c.l.b16 %v1216
    %v1526 = vunpack.c.l.b16 %v1217
    %v1527 = vunpack.c.h.b16 %v1217
    %v1528 = vunpack.c.l.b16 %v1218
    %v1529 = vunpack.c.l.b16 %v1219
    %v1530 = vunpack.c.h.b16 %v1219
    %v1531 = vunpack.c.l.b16 %v1220
    %v1532 = vunpack.c.l.b16 %v1221
    %v1533 = vunpack.c.h.b16 %v1221
    %v1534 = vunpack.c.l.b16 %v1222
    %v1535 = vunpack.c.l.b16 %v1223
    %v1536 = vunpack.c.h.b16 %v1223
    %v1537 = vunpack.c.l.b16 %v1224
    %v1538 = vunpack.c.l.b16 %v1225
    %v1539 = vunpack.c.h.b16 %v1225
    %v1540 = vunpack.c.l.b16 %v1226
    %v1541 = vunpack.c.l.b16 %v1227
    %v1542 = vunpack.c.h.b16 %v1227
    %v1543 = vunpack.c.l.b16 %v1228
    %v1544 = vunpack.c.l.b16 %v1229
    %v1545 = vunpack.c.h.b16 %v1229
    %v1546 = vunpack.c.l.b16 %v1230
    %v1547 = vunpack.c.l.b16 %v1231
    %v1548 = vunpack.c.h.b16 %v1231
    %v1549 = vunpack.c.l.b16 %v1232
    %v1550 = vunpack.c.l.b16 %v1233
    %v1551 = vunpack.c.h.b16 %v1233
    %v1552 = vunpack.c.l.b16 %v1234
    %v1553 = vunpack.c.l.b16 %v1235
    %v1554 = vunpack.c.h.b16 %v1235
    %v1555 = vunpack.c.l.b16 %v1236
    %v1556 = vunpack.c.l.b16 %v1237
    %v1557 = vunpack.c.h.b16 %v1237
    %v1558 = vunpack.c.l.b16 %v1238
    %v1559 = vunpack.c.l.b16 %v1239
    %v1560 = vunpack.c.h.b16 %v1239
    %v1561 = vunpack.c.l.b16 %v1240
    %v1562 = vunpack.c.l.b16 %v1241
    %v1563 = vunpack.c.h.b16 %v1241
    %v1564 = vunpack.c.l.b16 %v1242
    %v1565 = vunpack.c.l.b16 %v1243
    %v1566 = vunpack.c.h.b16 %v1243
    %v1567 = vunpack.c.l.b16 %v1244
    %v1568 = vunpack.c.l.b16 %v1245
    %v1569 = vunpack.c.h.b16 %v1245
    %v1570 = vunpack.c.l.b16 %v1246
    %v1571 = vunpack.c.l.b16 %v1247
    %v1572 = vunpack.c.h.b16 %v1247
    %v1573 = vunpack.c.l.b16 %v1248
    %v1574 = vunpack.c.l.b16 %v1249
    %v1575 = vunpack.c.h.b16 %v1249
    %v1576 = vunpack.c.l.b16 %v1250
    %v1577 = vunpack.c.l.b16 %v1251
    %v1578 = vunpack.c.h.b16 %v1251
    %v1579 = vunpack.c.l.b16 %v1252
    %v1580 = vunpack.c.l.b16 %v1253
    %v1581 = vunpack.c.h.b16 %v1253
    %v1582 = vunpack.c.l.b16 %v1254
    %v1583 = vunpack.c.l.b16 %v1255
    %v1584 = vunpack.c.h.b16 %v1255
    %v1585 = vunpack.c.l.b16 %v1256
    %v1586 = vunpack.c.l.b16 %v1257
    %v1587 = vunpack.c.h.b16 %v1257
    %v1588 = vunpack.c.l.b16 %v1258
    %v1589 = vunpack.c.l.b16 %v1259
    %v1590 = vunpack.c.h.b16 %v1259
    %v1591 = vunpack.c.l.b16 %v1260
    %v1592 = vunpack.c.l.b16 %v1261
    %v1593 = vunpack.c.h.b16 %v1261
    %v1594 = vunpack.c.l.b16 %v1262
    %v1595 = vunpack.c.l.b16 %v1263
    %v1596 = vunpack.c.h.b16 %v1263
    %v1597 = vunpack.c.l.b16 %v1264
    %v1598 = vunpack.c.l.b16 %v1265
    %v1599 = vunpack.c.h.b16 %v1265
    %v1600 = vunpack.c.l.b16 %v1266
    %v1601 = vunpack.c.l.b16 %v1267
    %v1602 = vunpack.c.h.b16 %v1267
    %v1603 = vunpack.c.l.b16 %v1268
    %v1604 = vunpack.c.l.b16 %v1269
    %v1605 = vunpack.c.h.b16 %v1269
    %v1606 = vunpack.c.l.b16 %v1270
    %v1607 = vunpack.c.l.b16 %v1271
    %v1608 = vunpack.c.h.b16 %v1271
    %v1609 = vunpack.c.l.b16 %v1272
    %v1610 = vunpack.c.l.b16 %v1273
    %v1611 = vunpack.c.h.b16 %v1273
    %v1612 = vunpack.c.l.b16 %v1274
    %v1613 = vunpack.c.l.b16 %v1275
    %v1614 = vunpack.c.h.b16 %v1275
    %v1615 = vunpack.c.l.b16 %v1276
    %v1616 = vpack.c.b16 %v1475, %v1472
    %v1617 = vpack.c.b16 %v1476, %v1473
    %v1618 = vpack.c.b16 %v1477, %v1474
    %v1619 = vpack.c.b16 %v1481, %v1478
    %v1620 = vpack.c.b16 %v1482, %v1479
    %v1621 = vpack.c.b16 %v1483, %v1480
    %v1622 = vpack.c.b16 %v1487, %v1484
    %v1623 = vpack.c.b16 %v1488, %v1485
    %v1624 = vpack.c.b16 %v1489, %v1486
    %v1625 = vpack.c.b16 %v1493, %v1490
    %v1626 = vpack.c.b16 %v1494, %v1491
    %v1627 = vpack.c.b16 %v1495, %v1492
    %v1628 = vpack.c.b16 %v1499, %v1496
    %v1629 = vpack.c.b16 %v1500, %v1497
    %v1630 = vpack.c.b16 %v1501, %v1498
    %v1631 = vpack.c.b16 %v1505, %v1502
    %v1632 = vpack.c.b16 %v1506, %v1503
    %v1633 = vpack.c.b16 %v1507, %v1504
    %v1634 = vpack.c.b16 %v1511, %v1508
    %v1635 = vpack.c.b16 %v1512, %v1509
    %v1636 = vpack.c.b16 %v1513, %v1510
    %v1637 = vpack.c.b16 %v1517, %v1514
    %v1638 = vpack.c.b16 %v1518, %v1515
    %v1639 = vpack.c.b16 %v1519, %v1516
    %v1640 = vpack.c.b16 %v1523, %v1520
    %v1641 = vpack.c.b16 %v1524, %v1521
    %v1642 = vpack.c.b16 %v1525, %v1522
    %v1643 = vpack.c.b16 %v1529, %v1526
    %v1644 = vpack.c.b16 %v1530, %v1527
    %v1645 = vpack.c.b16 %v1531, %v1528
    %v1646 = vpack.c.b16 %v1535, %v1532
    %v1647 = vpack.c.b16 %v1536, %v1533
    %v1648 = vpack.c.b16 %v1537, %v1534
    %v1649 = vpack.c.b16 %v1541, %v1538
    %v1650 = vpack.c.b16 %v1542, %v1539
    %v1651 = vpack.c.b16 %v1543, %v1540
    %v1652 = vpack.c.b16 %v1547, %v1544
    %v1653 = vpack.c.b16 %v1548, %v1545
    %v1654 = vpack.c.b16 %v1549, %v1546
    %v1655 = vpack.c.b16 %v1553, %v1550
    %v1656 = vpack.c.b16 %v1554, %v1551
    %v1657 = vpack.c.b16 %v1555, %v1552
    %v1658 = vpack.c.b16 %v1559, %v1556
    %v1659 = vpack.c.b16 %v1560, %v1557
    %v1660 = vpack.c.b16 %v1561, %v1558
    %v1661 = vpack.c.b16 %v1565, %v1562
    %v1662 = vpack.c.b16 %v1566, %v1563
    %v1663 = vpack.c.b16 %v1567, %v1564
    %v1664 = vpack.c.b16 %v1571, %v1568
    %v1665 = vpack.c.b16 %v1572, %v1569
    %v1666 = vpack.c.b16 %v1573, %v1570
    %v1667 = vpack.c.b16 %v1577, %v1574
    %v1668 = vpack.c.b16 %v1578, %v1575
    %v1669 = vpack.c.b16 %v1579, %v1576
    %v1670 = vpack.c.b16 %v1583, %v1580
    %v1671 = vpack.c.b16 %v1584, %v1581
    %v1672 = vpack.c.b16 %v1585, %v1582
    %v1673 = vpack.c.b16 %v1589, %v1586
    %v1674 = vpack.c.b16 %v1590, %v1587
    %v1675 = vpack.c.b16 %v1591, %v1588
    %v1676 = vpack.c.b16 %v1595, %v1592
    %v1677 = vpack.c.b16 %v1596, %v1593
    %v1678 = vpack.c.b16 %v1597, %v1594
    %v1679 = vpack.c.b16 %v1601, %v1598
    %v1680 = vpack.c.b16 %v1602, %v1599
    %v1681 = vpack.c.b16 %v1603, %v1600
    %v1682 = vpack.c.b16 %v1607, %v1604
    %v1683 = vpack.c.b16 %v1608, %v1605
    %v1684 = vpack.c.b16 %v1609, %v1606
    %v1685 = vpack.c.b16 %v1613, %v1610
    %v1686 = vpack.c.b16 %v1614, %v1611
    %v1687 = vpack.c.b16 %v1615, %v1612
    %1760 = vmatprep.subr.bf16.mxu0 %v1617
    %1761 = vmatpush1.bf16.msra.mxu0 %v1616
    %1762 = vmatprep.subr.bf16.mxu0 %v1620
    %1763 = vmatpush1.bf16.msra.mxu0 %v1619
    %1764 = vmatprep.subr.bf16.mxu0 %v1623
    %1765 = vmatpush1.bf16.msra.mxu0 %v1622
    %1766 = vmatprep.subr.bf16.mxu0 %v1626
    %1767 = vmatpush1.bf16.msra.mxu0 %v1625
    %1768 = vmatprep.subr.bf16.mxu0 %v1629
    %1769 = vmatpush1.bf16.msra.mxu0 %v1628
    %1770 = vmatprep.subr.bf16.mxu0 %v1632
    %1771 = vmatpush1.bf16.msra.mxu0 %v1631
    %1772 = vmatprep.subr.bf16.mxu0 %v1635
    %1773 = vmatpush1.bf16.msra.mxu0 %v1634
    %1774 = vmatprep.subr.bf16.mxu0 %v1638
    %1775 = vmatpush1.bf16.msra.mxu0 %v1637
    %1776 = vmatprep.subr.bf16.mxu0 %v1641
    %1777 = vmatpush1.bf16.msra.mxu0 %v1640
    %1778 = vmatprep.subr.bf16.mxu0 %v1644
    %1779 = vmatpush1.bf16.msra.mxu0 %v1643
    %1780 = vmatprep.subr.bf16.mxu0 %v1647
    %1781 = vmatpush1.bf16.msra.mxu0 %v1646
    %1782 = vmatprep.subr.bf16.mxu0 %v1650
    %1783 = vmatpush1.bf16.msra.mxu0 %v1649
    %1784 = vmatprep.subr.bf16.mxu0 %v1653
    %1785 = vmatpush1.bf16.msra.mxu0 %v1652
    %1786 = vmatprep.subr.bf16.mxu0 %v1656
    %1787 = vmatpush1.bf16.msra.mxu0 %v1655
    %1788 = vmatprep.subr.bf16.mxu0 %v1659
    %1789 = vmatpush1.bf16.msra.mxu0 %v1658
    %1790 = vmatprep.subr.bf16.mxu0 %v1662
    %1791 = vmatpush1.bf16.msra.mxu0 %v1661
    %1792 = vmatprep.mubr.bf16.mxu0 %v1371
    %1793 = vmatmul.mubr.bf16.gmra.mrb[0].mxu0 %v1370
    %v1794 = vpop.f32.mrb[0].mxu0
    %v1795 = vadd.f32 0.0, %v1794
    %v1796 = vpop.f32.mrb[0].mxu0
    %v1797 = vadd.f32 0.0, %v1796
    %v1798 = vpop.f32.mrb[0].mxu0
    %v1799 = vadd.f32 0.0, %v1798
    %v1800 = vpop.f32.mrb[0].mxu0
    %v1801 = vadd.f32 0.0, %v1800
    %1802 = vmatprep.mubr.bf16.mxu0 %v1374
    %1803 = vmatmul.mubr.bf16.gmra.mrb[0].mxu0 %v1373
    %v1804 = vpop.f32.mrb[0].mxu0
    %v1805 = vadd.f32 0.0, %v1804
    %v1806 = vpop.f32.mrb[0].mxu0
    %v1807 = vadd.f32 0.0, %v1806
    %v1808 = vpop.f32.mrb[0].mxu0
    %v1809 = vadd.f32 0.0, %v1808
    %v1810 = vpop.f32.mrb[0].mxu0
    %v1811 = vadd.f32 0.0, %v1810
    %1812 = vdwg.mxu0
    %1813 = vmatprep.subr.bf16.mxu0 %v1665
    %1814 = vmatpush1.bf16.msra.mxu0 %v1664
    %1815 = vmatprep.subr.bf16.mxu0 %v1668
    %1816 = vmatpush1.bf16.msra.mxu0 %v1667
    %1817 = vmatprep.subr.bf16.mxu0 %v1671
    %1818 = vmatpush1.bf16.msra.mxu0 %v1670
    %1819 = vmatprep.subr.bf16.mxu0 %v1674
    %1820 = vmatpush1.bf16.msra.mxu0 %v1673
    %1821 = vmatprep.subr.bf16.mxu0 %v1677
    %1822 = vmatpush1.bf16.msra.mxu0 %v1676
    %1823 = vmatprep.subr.bf16.mxu0 %v1680
    %1824 = vmatpush1.bf16.msra.mxu0 %v1679
    %1825 = vmatprep.subr.bf16.mxu0 %v1683
    %1826 = vmatpush1.bf16.msra.mxu0 %v1682
    %1827 = vmatprep.subr.bf16.mxu0 %v1686
    %1828 = vmatpush1.bf16.msra.mxu0 %v1685
    %1829 = vmatprep.subr.bf16.mxu0 0
    %1830 = vmatpush1.bf16.msra.mxu0 0
    %1831 = vmatprep.subr.bf16.mxu0 0
    %1832 = vmatpush1.bf16.msra.mxu0 0
    %1833 = vmatprep.subr.bf16.mxu0 0
    %1834 = vmatpush1.bf16.msra.mxu0 0
    %1835 = vmatprep.subr.bf16.mxu0 0
    %1836 = vmatpush1.bf16.msra.mxu0 0
    %1837 = vmatprep.subr.bf16.mxu0 0
    %1838 = vmatpush1.bf16.msra.mxu0 0
    %1839 = vmatprep.subr.bf16.mxu0 0
    %1840 = vmatpush1.bf16.msra.mxu0 0
    %1841 = vmatprep.subr.bf16.mxu0 0
    %1842 = vmatpush1.bf16.msra.mxu0 0
    %1843 = vmatprep.subr.bf16.mxu0 0
    %1844 = vmatpush1.bf16.msra.mxu0 0
    %1845 = vmatprep.mubr.bf16.mxu0 0
    %1846 = vmatmul.mubr.bf16.gmra.mrb[0].mxu0 %v1372
    %v1847 = vpop.f32.mrb[0].mxu0
    %v1848 = vadd.f32 %v1795, %v1847
    %v1849 = vpop.f32.mrb[0].mxu0
    %v1850 = vadd.f32 %v1797, %v1849
    %v1851 = vpop.f32.mrb[0].mxu0
    %v1852 = vadd.f32 %v1799, %v1851
    %v1853 = vpop.f32.mrb[0].mxu0
    %v1854 = vadd.f32 %v1801, %v1853
    %1855 = vmatprep.mubr.bf16.mxu0 0
    %1856 = vmatmul.mubr.bf16.gmra.mrb[0].mxu0 %v1375
    %v1857 = vpop.f32.mrb[0].mxu0
    %v1858 = vadd.f32 %v1805, %v1857
    %v1859 = vpop.f32.mrb[0].mxu0
    %v1860 = vadd.f32 %v1807, %v1859
    %v1861 = vpop.f32.mrb[0].mxu0
    %v1862 = vadd.f32 %v1809, %v1861
    %v1863 = vpop.f32.mrb[0].mxu0
    %v1864 = vadd.f32 %v1811, %v1863
    %1865 = vdwg.mxu0
    %1866 = vmatprep.subr.bf16.mxu0 0
    %1867 = vmatpush1.bf16.msra.mxu0 %v1618
    %1868 = vmatprep.subr.bf16.mxu0 0
    %1869 = vmatpush1.bf16.msra.mxu0 %v1621
    %1870 = vmatprep.subr.bf16.mxu0 0
    %1871 = vmatpush1.bf16.msra.mxu0 %v1624
    %1872 = vmatprep.subr.bf16.mxu0 0
    %1873 = vmatpush1.bf16.msra.mxu0 %v1627
    %1874 = vmatprep.subr.bf16.mxu0 0
    %1875 = vmatpush1.bf16.msra.mxu0 %v1630
    %1876 = vmatprep.subr.bf16.mxu0 0
    %1877 = vmatpush1.bf16.msra.mxu0 %v1633
    %1878 = vmatprep.subr.bf16.mxu0 0
    %1879 = vmatpush1.bf16.msra.mxu0 %v1636
    %1880 = vmatprep.subr.bf16.mxu0 0
    %1881 = vmatpush1.bf16.msra.mxu0 %v1639
    %1882 = vmatprep.subr.bf16.mxu0 0
    %1883 = vmatpush1.bf16.msra.mxu0 %v1642
    %1884 = vmatprep.subr.bf16.mxu0 0
    %1885 = vmatpush1.bf16.msra.mxu0 %v1645
    %1886 = vmatprep.subr.bf16.mxu0 0
    %1887 = vmatpush1.bf16.msra.mxu0 %v1648
    %1888 = vmatprep.subr.bf16.mxu0 0
    %1889 = vmatpush1.bf16.msra.mxu0 %v1651
    %1890 = vmatprep.subr.bf16.mxu0 0
    %1891 = vmatpush1.bf16.msra.mxu0 %v1654
    %1892 = vmatprep.subr.bf16.mxu0 0
    %1893 = vmatpush1.bf16.msra.mxu0 %v1657
    %1894 = vmatprep.subr.bf16.mxu0 0
    %1895 = vmatpush1.bf16.msra.mxu0 %v1660
    %1896 = vmatprep.subr.bf16.mxu0 0
    %1897 = vmatpush1.bf16.msra.mxu0 %v1663
    %1898 = vmatprep.mubr.bf16.mxu0 %v1371
    %1899 = vmatmul.mubr.bf16.gmra.mrb[0].mxu0 %v1370
    %v1900 = vpop.f32.mrb[0].mxu0
    %v1901 = vadd.f32 0.0, %v1900
    %v1902 = vpop.f32.mrb[0].mxu0
    %v1903 = vpop.f32.mrb[0].mxu0
    %v1904 = vadd.f32 0.0, %v1903
    %v1905 = vpop.f32.mrb[0].mxu0
    %1906 = vmatprep.mubr.bf16.mxu0 %v1374
    %1907 = vmatmul.mubr.bf16.gmra.mrb[0].mxu0 %v1373
    %v1908 = vpop.f32.mrb[0].mxu0
    %v1909 = vadd.f32 0.0, %v1908
    %v1910 = vpop.f32.mrb[0].mxu0
    %v1911 = vpop.f32.mrb[0].mxu0
    %v1912 = vadd.f32 0.0, %v1911
    %v1913 = vpop.f32.mrb[0].mxu0
    %1914 = vdwg.mxu0
    %1915 = vmatprep.subr.bf16.mxu0 0
    %1916 = vmatpush1.bf16.msra.mxu0 %v1666
    %1917 = vmatprep.subr.bf16.mxu0 0
    %1918 = vmatpush1.bf16.msra.mxu0 %v1669
    %1919 = vmatprep.subr.bf16.mxu0 0
    %1920 = vmatpush1.bf16.msra.mxu0 %v1672
    %1921 = vmatprep.subr.bf16.mxu0 0
    %1922 = vmatpush1.bf16.msra.mxu0 %v1675
    %1923 = vmatprep.subr.bf16.mxu0 0
    %1924 = vmatpush1.bf16.msra.mxu0 %v1678
    %1925 = vmatprep.subr.bf16.mxu0 0
    %1926 = vmatpush1.bf16.msra.mxu0 %v1681
    %1927 = vmatprep.subr.bf16.mxu0 0
    %1928 = vmatpush1.bf16.msra.mxu0 %v1684
    %1929 = vmatprep.subr.bf16.mxu0 0
    %1930 = vmatpush1.bf16.msra.mxu0 %v1687
    %1931 = vmatprep.subr.bf16.mxu0 0
    %1932 = vmatpush1.bf16.msra.mxu0 0
    %1933 = vmatprep.subr.bf16.mxu0 0
    %1934 = vmatpush1.bf16.msra.mxu0 0
    %1935 = vmatprep.subr.bf16.mxu0 0
    %1936 = vmatpush1.bf16.msra.mxu0 0
    %1937 = vmatprep.subr.bf16.mxu0 0
    %1938 = vmatpush1.bf16.msra.mxu0 0
    %1939 = vmatprep.subr.bf16.mxu0 0
    %1940 = vmatpush1.bf16.msra.mxu0 0
    %1941 = vmatprep.subr.bf16.mxu0 0
    %1942 = vmatpush1.bf16.msra.mxu0 0
    %1943 = vmatprep.subr.bf16.mxu0 0
    %1944 = vmatpush1.bf16.msra.mxu0 0
    %1945 = vmatprep.subr.bf16.mxu0 0
    %1946 = vmatpush1.bf16.msra.mxu0 0
    %1947 = vmatprep.mubr.bf16.mxu0 0
    %1948 = vmatmul.mubr.bf16.gmra.mrb[0].mxu0 %v1372
    %v1949 = vpop.f32.mrb[0].mxu0
    %v1950 = vadd.f32 %v1901, %v1949
    %v1951 = vpop.f32.mrb[0].mxu0
    %v1952 = vpop.f32.mrb[0].mxu0
    %v1953 = vadd.f32 %v1904, %v1952
    %v1954 = vpop.f32.mrb[0].mxu0
    %1955 = vmatprep.mubr.bf16.mxu0 0
    %1956 = vmatmul.mubr.bf16.gmra.mrb[0].mxu0 %v1375
    %v1957 = vpop.f32.mrb[0].mxu0
    %v1958 = vadd.f32 %v1909, %v1957
    %v1959 = vpop.f32.mrb[0].mxu0
    %v1960 = vpop.f32.mrb[0].mxu0
    %v1961 = vadd.f32 %v1912, %v1960
    %v1962 = vpop.f32.mrb[0].mxu0
    %1963 = vdwg.mxu0
    %v1964 = vrot.slane %v1848, 7
    %v1965 = vrot.slane %v1852, 7
    %v1966 = vrot.slane %v1858, 7
    %v1967 = vrot.slane %v1862, 7
    %v1968 = vsel %vm514, %v1966, %v1967
    %v1969 = vsel %vm514, %v1965, %v1966
    %v1970 = vsel %vm514, %v1964, %v1965
    %v1971 = vsel %vm514, %v1967, %v1964
    %v1972 = vsel %vm523, 0.0, %v1971
    %v1973 = vsel %vm524, 0.0, %v1970
    %v1974 = vsel %vm525, 0.0, %v1969
    %v1975 = vsel %vm526, 0.0, %v1968
    %v1976 = vadd.f32 %v1972, %v1850
    %v1977 = vadd.f32 %v1973, %v1854
    %v1978 = vadd.f32 %v1974, %v1860
    %v1979 = vadd.f32 %v1975, %v1864
    %v1980 = vrot.slane %v1950, 1
    %v1981 = vrot.slane %v1953, 1
    %v1982 = vrot.slane %v1958, 1
    %v1983 = vrot.slane %v1961, 1
    %v1984 = vsel %vm539, %v1982, %v1983
    %v1985 = vsel %vm539, %v1981, %v1982
    %v1986 = vsel %vm539, %v1980, %v1981
    %v1987 = vsel %vm539, %v1983, %v1980
    %v1988 = vsel %vm548, 0.0, %v1986
    %v1989 = vsel %vm549, 0.0, %v1985
    %v1990 = vsel %vm550, 0.0, %v1984
    %v1991 = vsel %vm551, 0.0, %v1987
    %v1992 = vadd.f32 %v1976, %v1988
    %v1993 = vadd.f32 %v1977, %v1989
    %v1994 = vadd.f32 %v1978, %v1990
    %v1995 = vadd.f32 %v1979, %v1991
    %v1997 = vlaneseq
    %v1998 = vshrl.u32 %v1997, 7
    %v1999 = vsub.s32 0, %v1998
    %v2000 = vrot.slane %v1277, %v1999
    %v2002 = vadd.f32 %v1992, %v2000
    %v2003 = vadd.f32 %v1993, %v2000
    %v2004 = vadd.f32 %v1994, %v2000
    %v2005 = vadd.f32 %v1995, %v2000
    %v2006 = vsel %vm574, %v2002, 0.0
    %v2007 = vsel %vm575, %v2003, 0.0
    %v2008 = vsel %vm576, %v2004, 0.0
    %v2009 = vsel %vm577, %v2005, 0.0
    %2010 = vst [vmem:[#allocation13 + $0x18] sm:$0xff] %v2006
    %2011 = vst [vmem:[#allocation13 + $0x38] sm:$0xff] %v2007
    %2012 = vst [vmem:[#allocation13 + $0x58] sm:$0xff] %v2008
    %2013 = vst [vmem:[#allocation13 + $0x78] sm:$0xff] %v2009
    %v2014 = vadd.f32 %v2006, %v2007
    %v2015 = vadd.f32 %v2014, %v2008
    %v2016 = vadd.f32 %v2015, %v2009
    %v2017 = vrot.slane %v2016, 4
    %v2018 = vadd.f32 %v2016, %v2017
    %v2019 = vrot.slane %v2018, 2
    %v2020 = vadd.f32 %v2018, %v2019
    %v2021 = vrot.slane %v2020, 1
    %v2022 = vadd.f32 %v2020, %v2021
    %2023 = vst.msk [vmem:[#allocation2 + $0x3] sm:$0x1] %vm187, %v2022
    %v2024 = vmul.f32 %v2006, %v2006
    %v2025 = vmul.f32 %v2007, %v2007
    %v2026 = vmul.f32 %v2008, %v2008
    %v2027 = vmul.f32 %v2009, %v2009
    %v2028 = vadd.f32 %v2024, %v2025
    %v2029 = vadd.f32 %v2028, %v2026
    %v2030 = vadd.f32 %v2029, %v2027
    %v2031 = vrot.slane %v2030, 4
    %v2032 = vadd.f32 %v2030, %v2031
    %v2033 = vrot.slane %v2032, 2
    %v2034 = vadd.f32 %v2032, %v2033
    %v2035 = vrot.slane %v2034, 1
    %v2036 = vadd.f32 %v2034, %v2035
    %2037 = vst.msk [vmem:[#allocation3 + $0x3] sm:$0x1] %vm187, %v2036
    // Predicated region
    $region66: #{tpu_custom_call.1} parent=1 // pred_check
      _
    $region67: #{tpu_custom_call.1} parent=1 // pred_check_branch
      %2039 = sbr.rel (0) target = $region69
    $region68: #{tpu_custom_call.1} parent=1 // pred_region
      %s2041 = ssub.s32 2048, 2048
      %2042 = vsyncadd [#allocation7], %s2041
      %s2043 = sshll.u32 [#allocation13], 4
      %s2044 = int_to_ptr.vmem [resolvable:$true] %s2043
      %2049 = dma.vmem_to_hbm [thread:$0]  %s2044, 2048, %s13, [#allocation7], 512, 512, 32
    $region69: #{tpu_custom_call.1} parent=1 // pred_fallthru
      _
    // Predicated region
    $region70: #{tpu_custom_call.1} parent=1 // pred_check
      _
    $region71: #{tpu_custom_call.1} parent=1 // pred_check_branch
      %2051 = sbr.rel (0) target = $region73
    $region72: #{tpu_custom_call.1} parent=1 // pred_region
      %2052 = dma.done [#allocation7], 2048
    $region73: #{tpu_custom_call.1} parent=1 // pred_fallthru
      _
    %2053 = vsyncpa [#allocation6], 1
    %2054 = vsyncpa [#allocation9], 1
    %2055 = vsyncpa [#allocation12], 1
    %2056 = vsyncpa [#allocation7], 1
  %2057 = vsyncmov [#allocation4]
  %s2058 = vpop.sfrf %2057
  %p2059 = scmp.eq.s32.totalorder %s2058, 0
  %p2060 = pneg %p2059
  %2062 = shalt.err (%p2060)

</llo_original>
